<compile_context>
chip_gen: v6e
topology: v6e:2x2x1
jax: 0.10.0
libtpu: 0.0.40
codegen_flags: <defaults>
</compile_context>

<pallas_src>
import functools

import jax
import jax.numpy as jnp
from jax import lax
from jax.experimental import pallas as pl
from jax.experimental.pallas import tpu as pltpu


# -----------------------------------------------------------------------------
# Pallas kernel: fused depthwise 3x3 conv + bias + residual for one
# (batch, channel-tile) block, NHWC layout, halo built in VMEM.
# -----------------------------------------------------------------------------
def _poscnn_kernel(x_ref, w_ref, b_ref, o_ref, xp_ref):
    """x_ref : (1, H, W, CT)    input block, native dtype (no halo)
       w_ref : (9, CT)          per-channel taps (f32), row k = 3*di + dj
       b_ref : (1, CT)          conv bias (f32)
       o_ref : (1, H, W, CT)    output block, native dtype
       xp_ref: (H+2, W+2, CT)   f32 VMEM scratch holding the halo-padded block
    """
    H, W = o_ref.shape[1], o_ref.shape[2]

    # Single block load, upcast once (f32 compute everywhere; v5e has no bf16 VALU).
    x = x_ref[0].astype(jnp.float32)                      # (H, W, CT)

    # Build the 1-pixel halo entirely in VMEM: zero border, interior = x.
    xp_ref[...] = jnp.zeros_like(xp_ref)
    xp_ref[1:H + 1, 1:W + 1, :] = x

    w = w_ref[...]                                        # (9, CT)

    # Residual + bias, f32 accumulator.
    acc = x + b_ref[0][None, None, :]

    # 3x3 depthwise taps.  The width (sublane) shift is done ONCE per dj via a
    # shifted load from the padded scratch; the height shifts are free major-dim
    # value slices, so the per-tap work is a plain VPU multiply-add.
    for dj in range(3):
        col = xp_ref[:, dj:dj + W, :]                     # (H+2, W, CT)
        for di in range(3):
            acc = acc + col[di:di + H, :, :] * w[3 * di + dj][None, None, :]

    o_ref[0] = acc.astype(o_ref.dtype)


def _pick_channel_tile(H, W, Cp):
    """Whole-C blocks for typical PosCNN sizes (tiny token grids).  Only tile
    channels (in lane-dense 128-multiples) if the f32 halo scratch would exceed
    a conservative per-buffer budget -- keeps the kernel safe on v7x's 64 MiB
    VMEM if it is ever reused for much larger C / feature maps."""
    budget = 4 << 20   # bytes, per f32 scratch block
    ct = Cp
    while (H + 2) * (W + 2) * ct * 4 > budget and ct % 256 == 0:
        ct //= 2
    return ct


# -----------------------------------------------------------------------------
# Forward wrapper (jitted)
# -----------------------------------------------------------------------------
@functools.partial(jax.jit, static_argnames=("H", "W", "s"))
def poscnn_forward(x, weight, bias, *, H, W, s=1):
    """PosCNN forward.  x: (B, N, C) tokens, weight: (C, 1, 3, 3), bias: (C,).

    Returns (B, N, C) tokens (x.dtype), matching the PyTorch module with s == 1.
    """
    if s != 1:
        # TODO(synk): strided (s != 1, no residual) variant not implemented.
        raise NotImplementedError("PosCNN with s != 1 is not implemented.")

    B, N, C = x.shape
    assert N == H * W, (N, H, W)

    # Channels-last view of the token grid (pure reshape, no data shuffles).
    x4 = x.reshape(B, H, W, C)
    w9 = weight.reshape(C, 9).T.astype(jnp.float32)       # (9, C), row k = 3*di + dj
    b2 = bias.reshape(1, C).astype(jnp.float32)

    # Lane-dense channel axis: pad C up to a multiple of 128 so output stores are
    # unmasked full-lane vst's.  Main path (C % 128 == 0) pays nothing.
    Cp = ((C + 127) // 128) * 128
    if Cp != C:
        pad = Cp - C
        x4 = jnp.pad(x4, ((0, 0), (0, 0), (0, 0), (0, pad)))
        w9 = jnp.pad(w9, ((0, 0), (0, pad)))
        b2 = jnp.pad(b2, ((0, 0), (0, pad)))

    ct = _pick_channel_tile(H, W, Cp)
    n_ct = Cp // ct
    itemsize = jnp.dtype(x.dtype).itemsize

    out = pl.pallas_call(
        _poscnn_kernel,
        out_shape=jax.ShapeDtypeStruct((B, H, W, Cp), x.dtype),
        grid=(B, n_ct),
        in_specs=[
            pl.BlockSpec((1, H, W, ct), lambda b, c: (b, 0, 0, c)),
            pl.BlockSpec((9, ct), lambda b, c: (0, c)),
            pl.BlockSpec((1, ct), lambda b, c: (0, c)),
        ],
        out_specs=pl.BlockSpec((1, H, W, ct), lambda b, c: (b, 0, 0, c)),
        scratch_shapes=[pltpu.VMEM((H + 2, W + 2, ct), jnp.float32)],
        compiler_params=pltpu.CompilerParams(
            dimension_semantics=("parallel", "parallel")),
        cost_estimate=pl.CostEstimate(
            flops=20 * B * H * W * Cp,
            transcendentals=0,
            bytes_accessed=2 * B * H * W * Cp * itemsize + 10 * Cp * 4),
    )(x4, w9, b2)

    if Cp != C:
        out = out[..., :C]
    return out.reshape(B, N, C)


# -----------------------------------------------------------------------------
# Pure-JAX reference (PyTorch NCHW semantics) for correctness checking.
# -----------------------------------------------------------------------------
def poscnn_reference(x, weight, bias, H, W):
    B, N, C = x.shape
    feat = jnp.transpose(x, (0, 2, 1)).reshape(B, C, H, W).astype(jnp.float32)
    y = lax.conv_general_dilated(
        feat, weight.astype(jnp.float32),
        window_strides=(1, 1), padding=((1, 1), (1, 1)),
        dimension_numbers=("NCHW", "OIHW", "NCHW"),
        feature_group_count=C, precision=lax.Precision.HIGHEST)
    y = y + bias.astype(jnp.float32)[None, :, None, None] + feat
    return jnp.transpose(y.reshape(B, C, N), (0, 2, 1))


# -----------------------------------------------------------------------------
if __name__ == "__main__":
    key = jax.random.PRNGKey(0)

    def run_case(B, H, W, C, dtype=jnp.float32, atol=1e-3, rtol=1e-3):
        kx, kw, kb = jax.random.split(jax.random.fold_in(key, H * 1000 + C), 3)
        x = jax.random.normal(kx, (B, H * W, C), jnp.float32).astype(dtype)
        weight = jax.random.normal(kw, (C, 1, 3, 3), jnp.float32) * 0.1
        bias = jax.random.normal(kb, (C,), jnp.float32) * 0.1

        out = jax.block_until_ready(poscnn_forward(x, weight, bias, H=H, W=W))
        ref = jax.block_until_ready(poscnn_reference(x, weight, bias, H, W))

        assert out.shape == (B, H * W, C), out.shape
        assert out.dtype == dtype, out.dtype
        out_f32 = out.astype(jnp.float32)
        assert bool(jnp.all(jnp.isfinite(out_f32)))
        max_err = float(jnp.max(jnp.abs(out_f32 - ref)))
        assert bool(jnp.allclose(out_f32, ref, atol=atol, rtol=rtol)), max_err
        return out

    # Shapes consistent with how the surrounding model uses PosCNN (small token
    # grids, embed dim a multiple of 128), plus bf16 and an odd-C case.
    run_case(B=2, H=8, W=8, C=512)                                   # main f32 path
    run_case(B=2, H=8, W=8, C=512, dtype=jnp.bfloat16,
             atol=5e-2, rtol=5e-2)                                   # native bf16 I/O
    run_case(B=2, H=4, W=4, C=96)                                    # C padded to 128

    print("KERNEL_OK")
</pallas_src>

<mosaic_0001>
module attributes {stable_mosaic.version = 11 : i64} {
  func.func @_poscnn_kernel(%arg0: i32, %arg1: i32, %arg2: memref<1x8x8x512xf32, #tpu.memory_space<vmem>>, %arg3: memref<9x512xf32, #tpu.memory_space<vmem>>, %arg4: memref<1x512xf32, #tpu.memory_space<vmem>>, %arg5: memref<1x8x8x512xf32, #tpu.memory_space<vmem>>, %arg6: memref<10x10x512xf32, #tpu.memory_space<vmem>>) attributes {dimension_semantics = [#tpu.dimension_semantics<parallel>, #tpu.dimension_semantics<parallel>], iteration_bounds = array<i64: 2, 1>, scalar_prefetch = 0 : i64, scratch_operands = 1 : i64, tpu.core_type = #tpu.core_type<tc>, window_params = [{transform_indices = @transform_0, window_bounds = array<i64: 1, 8, 8, 512>}, {transform_indices = @transform_1, window_bounds = array<i64: 9, 512>}, {transform_indices = @transform_2, window_bounds = array<i64: 1, 512>}, {transform_indices = @transform_3, window_bounds = array<i64: 1, 8, 8, 512>}]} {
    %c0 = arith.constant 0 : index
    %c0_0 = arith.constant 0 : index
    %c0_1 = arith.constant 0 : index
    %c0_2 = arith.constant 0 : index
    %0 = vector.load %arg2[%c0, %c0_0, %c0_1, %c0_2] : memref<1x8x8x512xf32, #tpu.memory_space<vmem>>, vector<1x8x8x512xf32>
    %1 = vector.shape_cast %0 : vector<1x8x8x512xf32> to vector<8x8x512xf32>
    %cst = arith.constant 0.000000e+00 : f32
    %2 = vector.broadcast %cst : f32 to vector<10x10x512xf32>
    %c0_3 = arith.constant 0 : index
    %c0_4 = arith.constant 0 : index
    %c0_5 = arith.constant 0 : index
    %3 = vector.load %arg6[%c0_3, %c0_4, %c0_5] : memref<10x10x512xf32, #tpu.memory_space<vmem>>, vector<10x10x512xf32>
    tpu.vector_store %arg6[%c0_3, %c0_4, %c0_5], %2 {strides = array<i32>} : memref<10x10x512xf32, #tpu.memory_space<vmem>>, vector<10x10x512xf32>,
    %c1 = arith.constant 1 : index
    %c1_6 = arith.constant 1 : index
    %c0_7 = arith.constant 0 : index
    %4 = vector.load %arg6[%c1, %c1_6, %c0_7] : memref<10x10x512xf32, #tpu.memory_space<vmem>>, vector<8x8x512xf32>
    tpu.vector_store %arg6[%c1, %c1_6, %c0_7], %1 {strides = array<i32>} : memref<10x10x512xf32, #tpu.memory_space<vmem>>, vector<8x8x512xf32>,
    %c0_8 = arith.constant 0 : index
    %c0_9 = arith.constant 0 : index
    %5 = vector.load %arg3[%c0_8, %c0_9] : memref<9x512xf32, #tpu.memory_space<vmem>>, vector<9x512xf32>
    %c0_10 = arith.constant 0 : index
    %c0_11 = arith.constant 0 : index
    %6 = vector.load %arg4[%c0_10, %c0_11] : memref<1x512xf32, #tpu.memory_space<vmem>>, vector<1x512xf32>
    %7 = vector.shape_cast %6 : vector<1x512xf32> to vector<512xf32>
    %8 = vector.shape_cast %7 : vector<512xf32> to vector<1x1x512xf32>
    %9 = vector.broadcast %8 : vector<1x1x512xf32> to vector<8x8x512xf32>
    %10 = arith.addf %1, %9 : vector<8x8x512xf32>
    %c0_12 = arith.constant 0 : index
    %c0_13 = arith.constant 0 : index
    %c0_14 = arith.constant 0 : index
    %11 = vector.load %arg6[%c0_12, %c0_13, %c0_14] : memref<10x10x512xf32, #tpu.memory_space<vmem>>, vector<10x8x512xf32>
    %12 = vector.extract_strided_slice %11 {offsets = [0, 0, 0], sizes = [8, 8, 512], strides = [1, 1, 1]} : vector<10x8x512xf32> to vector<8x8x512xf32>
    %13 = vector.extract_strided_slice %5 {offsets = [0, 0], sizes = [1, 512], strides = [1, 1]} : vector<9x512xf32> to vector<1x512xf32>
    %14 = vector.shape_cast %13 : vector<1x512xf32> to vector<512xf32>
    %15 = vector.shape_cast %14 : vector<512xf32> to vector<1x1x512xf32>
    %16 = vector.broadcast %15 : vector<1x1x512xf32> to vector<8x8x512xf32>
    %17 = arith.mulf %12, %16 : vector<8x8x512xf32>
    %18 = arith.addf %10, %17 : vector<8x8x512xf32>
    %19 = vector.extract_strided_slice %11 {offsets = [1, 0, 0], sizes = [8, 8, 512], strides = [1, 1, 1]} : vector<10x8x512xf32> to vector<8x8x512xf32>
    %20 = vector.extract_strided_slice %5 {offsets = [3, 0], sizes = [1, 512], strides = [1, 1]} : vector<9x512xf32> to vector<1x512xf32>
    %21 = vector.shape_cast %20 : vector<1x512xf32> to vector<512xf32>
    %22 = vector.shape_cast %21 : vector<512xf32> to vector<1x1x512xf32>
    %23 = vector.broadcast %22 : vector<1x1x512xf32> to vector<8x8x512xf32>
    %24 = arith.mulf %19, %23 : vector<8x8x512xf32>
    %25 = arith.addf %18, %24 : vector<8x8x512xf32>
    %26 = vector.extract_strided_slice %11 {offsets = [2, 0, 0], sizes = [8, 8, 512], strides = [1, 1, 1]} : vector<10x8x512xf32> to vector<8x8x512xf32>
    %27 = vector.extract_strided_slice %5 {offsets = [6, 0], sizes = [1, 512], strides = [1, 1]} : vector<9x512xf32> to vector<1x512xf32>
    %28 = vector.shape_cast %27 : vector<1x512xf32> to vector<512xf32>
    %29 = vector.shape_cast %28 : vector<512xf32> to vector<1x1x512xf32>
    %30 = vector.broadcast %29 : vector<1x1x512xf32> to vector<8x8x512xf32>
    %31 = arith.mulf %26, %30 : vector<8x8x512xf32>
    %32 = arith.addf %25, %31 : vector<8x8x512xf32>
    %c0_15 = arith.constant 0 : index
    %c1_16 = arith.constant 1 : index
    %c0_17 = arith.constant 0 : index
    %33 = vector.load %arg6[%c0_15, %c1_16, %c0_17] : memref<10x10x512xf32, #tpu.memory_space<vmem>>, vector<10x8x512xf32>
    %34 = vector.extract_strided_slice %33 {offsets = [0, 0, 0], sizes = [8, 8, 512], strides = [1, 1, 1]} : vector<10x8x512xf32> to vector<8x8x512xf32>
    %35 = vector.extract_strided_slice %5 {offsets = [1, 0], sizes = [1, 512], strides = [1, 1]} : vector<9x512xf32> to vector<1x512xf32>
    %36 = vector.shape_cast %35 : vector<1x512xf32> to vector<512xf32>
    %37 = vector.shape_cast %36 : vector<512xf32> to vector<1x1x512xf32>
    %38 = vector.broadcast %37 : vector<1x1x512xf32> to vector<8x8x512xf32>
    %39 = arith.mulf %34, %38 : vector<8x8x512xf32>
    %40 = arith.addf %32, %39 : vector<8x8x512xf32>
    %41 = vector.extract_strided_slice %33 {offsets = [1, 0, 0], sizes = [8, 8, 512], strides = [1, 1, 1]} : vector<10x8x512xf32> to vector<8x8x512xf32>
    %42 = vector.extract_strided_slice %5 {offsets = [4, 0], sizes = [1, 512], strides = [1, 1]} : vector<9x512xf32> to vector<1x512xf32>
    %43 = vector.shape_cast %42 : vector<1x512xf32> to vector<512xf32>
    %44 = vector.shape_cast %43 : vector<512xf32> to vector<1x1x512xf32>
    %45 = vector.broadcast %44 : vector<1x1x512xf32> to vector<8x8x512xf32>
    %46 = arith.mulf %41, %45 : vector<8x8x512xf32>
    %47 = arith.addf %40, %46 : vector<8x8x512xf32>
    %48 = vector.extract_strided_slice %33 {offsets = [2, 0, 0], sizes = [8, 8, 512], strides = [1, 1, 1]} : vector<10x8x512xf32> to vector<8x8x512xf32>
    %49 = vector.extract_strided_slice %5 {offsets = [7, 0], sizes = [1, 512], strides = [1, 1]} : vector<9x512xf32> to vector<1x512xf32>
    %50 = vector.shape_cast %49 : vector<1x512xf32> to vector<512xf32>
    %51 = vector.shape_cast %50 : vector<512xf32> to vector<1x1x512xf32>
    %52 = vector.broadcast %51 : vector<1x1x512xf32> to vector<8x8x512xf32>
    %53 = arith.mulf %48, %52 : vector<8x8x512xf32>
    %54 = arith.addf %47, %53 : vector<8x8x512xf32>
    %c0_18 = arith.constant 0 : index
    %c2 = arith.constant 2 : index
    %c0_19 = arith.constant 0 : index
    %55 = vector.load %arg6[%c0_18, %c2, %c0_19] : memref<10x10x512xf32, #tpu.memory_space<vmem>>, vector<10x8x512xf32>
    %56 = vector.extract_strided_slice %55 {offsets = [0, 0, 0], sizes = [8, 8, 512], strides = [1, 1, 1]} : vector<10x8x512xf32> to vector<8x8x512xf32>
    %57 = vector.extract_strided_slice %5 {offsets = [2, 0], sizes = [1, 512], strides = [1, 1]} : vector<9x512xf32> to vector<1x512xf32>
    %58 = vector.shape_cast %57 : vector<1x512xf32> to vector<512xf32>
    %59 = vector.shape_cast %58 : vector<512xf32> to vector<1x1x512xf32>
    %60 = vector.broadcast %59 : vector<1x1x512xf32> to vector<8x8x512xf32>
    %61 = arith.mulf %56, %60 : vector<8x8x512xf32>
    %62 = arith.addf %54, %61 : vector<8x8x512xf32>
    %63 = vector.extract_strided_slice %55 {offsets = [1, 0, 0], sizes = [8, 8, 512], strides = [1, 1, 1]} : vector<10x8x512xf32> to vector<8x8x512xf32>
    %64 = vector.extract_strided_slice %5 {offsets = [5, 0], sizes = [1, 512], strides = [1, 1]} : vector<9x512xf32> to vector<1x512xf32>
    %65 = vector.shape_cast %64 : vector<1x512xf32> to vector<512xf32>
    %66 = vector.shape_cast %65 : vector<512xf32> to vector<1x1x512xf32>
    %67 = vector.broadcast %66 : vector<1x1x512xf32> to vector<8x8x512xf32>
    %68 = arith.mulf %63, %67 : vector<8x8x512xf32>
    %69 = arith.addf %62, %68 : vector<8x8x512xf32>
    %70 = vector.extract_strided_slice %55 {offsets = [2, 0, 0], sizes = [8, 8, 512], strides = [1, 1, 1]} : vector<10x8x512xf32> to vector<8x8x512xf32>
    %71 = vector.extract_strided_slice %5 {offsets = [8, 0], sizes = [1, 512], strides = [1, 1]} : vector<9x512xf32> to vector<1x512xf32>
    %72 = vector.shape_cast %71 : vector<1x512xf32> to vector<512xf32>
    %73 = vector.shape_cast %72 : vector<512xf32> to vector<1x1x512xf32>
    %74 = vector.broadcast %73 : vector<1x1x512xf32> to vector<8x8x512xf32>
    %75 = arith.mulf %70, %74 : vector<8x8x512xf32>
    %76 = arith.addf %69, %75 : vector<8x8x512xf32>
    %c0_20 = arith.constant 0 : index
    %c0_21 = arith.constant 0 : index
    %c0_22 = arith.constant 0 : index
    %c0_23 = arith.constant 0 : index
    %77 = vector.load %arg5[%c0_20, %c0_21, %c0_22, %c0_23] : memref<1x8x8x512xf32, #tpu.memory_space<vmem>>, vector<1x8x8x512xf32>
    %78 = vector.shape_cast %77 : vector<1x8x8x512xf32> to vector<8x8x512xf32>
    %79 = vector.shape_cast %76 : vector<8x8x512xf32> to vector<1x8x8x512xf32>
    tpu.vector_store %arg5[%c0_20, %c0_21, %c0_22, %c0_23], %79 {strides = array<i32>} : memref<1x8x8x512xf32, #tpu.memory_space<vmem>>, vector<1x8x8x512xf32>,
    return
  }
  func.func @transform_0(%arg0: i32, %arg1: i32) -> (i32, i32, i32, i32) {
    %c0_i32 = arith.constant 0 : i32
    %c0_i32_0 = arith.constant 0 : i32
    %c0_i32_1 = arith.constant 0 : i32
    return %arg0, %c0_i32, %c0_i32_0, %arg1 : i32, i32, i32, i32
  }
  func.func @transform_1(%arg0: i32, %arg1: i32) -> (i32, i32) {
    %c0_i32 = arith.constant 0 : i32
    %c0_i32_0 = arith.constant 0 : i32
    return %c0_i32, %arg1 : i32, i32
  }
  func.func @transform_2(%arg0: i32, %arg1: i32) -> (i32, i32) {
    %c0_i32 = arith.constant 0 : i32
    %c0_i32_0 = arith.constant 0 : i32
    return %c0_i32, %arg1 : i32, i32
  }
  func.func @transform_3(%arg0: i32, %arg1: i32) -> (i32, i32, i32, i32) {
    %c0_i32 = arith.constant 0 : i32
    %c0_i32_0 = arith.constant 0 : i32
    %c0_i32_1 = arith.constant 0 : i32
    return %arg0, %c0_i32, %c0_i32_0, %arg1 : i32, i32, i32, i32
  }
}

</mosaic_0001>

<llo_original>
// kernel: poscnn_forward.1
$region0: #{poscnn_forward.1}
  #allocation0 [shape = 'u32[]', space=smem, size = 0x4, offset = 0x4, fixed_abs, tag = 'smem constant byte address 0x4 - core index']
  #allocation1 [shape = 'u32[144,128]{1,0:T(1,128)}', space=vmem, size = 0x12000, scoped, tag = 'internal scratch']
  #allocation2 [shape = 'f32[10,10,512]{2,1,0:T(8,128)}', space=vmem, size = 0x50000, scoped, tag = 'scratch operand']
  %s0 = inlined_call_operand.hbm [shape: f32[2,8,8,512], index: 0, kind: input, shape index: {}]
  %s1 = inlined_call_operand.vmem [shape: f32[9,512], index: 1, kind: input, shape index: {}]
  %s2 = inlined_call_operand.vmem [shape: f32[1,512], index: 2, kind: input, shape index: {}]
  %s3 = inlined_call_operand.hbm [shape: f32[2,8,8,512], index: 3, kind: output, shape index: {}]
  %s4 = sld [smem:[#allocation0]]
  $region49: #{poscnn_forward.1} parent=0
    _
  %s6 = ssub.s32 1, %s4
  %s7 = scalar_select 0, %s6, %s4
  $region1: #{poscnn_forward.1} parent=0
    #allocation3 [shape = 'u8[262144]{0}', space=vmem, size = 0x40000, scoped, tag = 'input window, operand 0']
    #allocation4 [shape = 's32[2]{0}', space=sflag, size = 0x8, scoped, tag = 'scoped memory for poscnn_forward.1']
    #allocation5 [shape = 's32[2]{0}', space=sflag, size = 0x8, scoped, tag = 'scoped memory for poscnn_forward.1']
    #allocation6 [shape = 'u8[262144]{0}', space=vmem, size = 0x40000, scoped, tag = 'output window, operand 0']
    %8 = vsyncpa [#allocation4], 0
    %s9 = scalar_lea.sflag [#allocation4], 1
    %10 = vsyncpa %s9, 0
    %11 = vsyncpa [#allocation5], 0
    %s12 = scalar_lea.sflag [#allocation5], 1
    %13 = vsyncpa %s12, 0
    loop: start=0, step=1, limit=4
    $region2: #{poscnn_forward.1} parent=1 // loop_pre_header
      _
    $region3: #{poscnn_forward.1} parent=1 // loop_header
      %s15 = sphi 0, %s19
      %p16 = scmp.ge.s32.totalorder %s15, 4
      %s22 = sphi 0, %s34
      %s23 = sphi 0, %s30
      %s24 = sphi 0, %s22
      %s25 = sphi 0, %s23
      %s26 = sphi 0, %s24
      %s27 = sphi 0, %s25
      %s39 = sphi 0, %s41
      %s42 = sphi 0, %s39
      %s43 = sphi 0, %s42
      %s59 = sphi 0, %s43
      %s65 = sphi 0, %s67
      %s68 = sphi 0, %s65
      %s69 = sphi 0, %s68
      %s85 = sphi 0, %s69
      %s91 = sphi 0, %s93
      %s94 = sphi 0, %s91
      %s95 = sphi 0, %s94
      %s111 = sphi 0, %s95
      %s119 = sphi 0, %s121
      %s122 = sphi 0, %s119
      %s123 = sphi 0, %s122
      %s139 = sphi 0, %s123
    $region4: #{poscnn_forward.1} parent=1 // loop_header_branch
      %18 = sbr.rel (%p16) target = $region8
    $region5: #{poscnn_forward.1} parent=1 // loop_body
      %s20 = ssub.s32 %s15, 1
      %s21 = ssub.s32 %s15, 2
      %s28 = sadd.s32 1, %s23
      %p29 = scmp.ge.s32.totalorder %s28, 1
      %s30 = scalar_select %p29, 0, %s28
      %s31 = sadd.s32 1, %s22
      %s32 = scalar_select %p29, %s31, %s22
      %p33 = scmp.ge.s32.totalorder %s32, 2
      %s34 = scalar_select %p33, 0, %s32
      %s35 = ssub.s32 %s22, %s34
      %s36 = ssub.s32 %s23, %s30
      %s37 = sor.u32 %s35, %s36
      %p38 = scmp.eq.s32.totalorder %s37, 0
      %s40 = sadd.s32 %s39, 1
      %s41 = scalar_select %p38, %s39, %s40
      %p44 = pneg %p38
      %p45 = scmp.eq.s32.totalorder %s15, 1
      %p46 = por %p44, %p45
      %p47 = scmp.ne.s32.totalorder %s39, %s42
      %p48 = scmp.eq.s32.totalorder %s15, 0
      %p49 = por %p47, %p48
      %p50 = scmp.ne.s32.totalorder %s39, %s42
      %p51 = scmp.eq.s32.totalorder %s20, 1
      %p52 = por %p50, %p51
      %p53 = scmp.ne.s32.totalorder %s42, %s43
      %p54 = scmp.eq.s32.totalorder %s20, 0
      %p55 = por %p53, %p54
      %p56 = scmp.ne.s32.totalorder %s42, %s43
      %p57 = scmp.eq.s32.totalorder %s21, 1
      %p58 = por %p56, %p57
      %p60 = scmp.ne.s32.totalorder %s43, %s59
      %p61 = scmp.eq.s32.totalorder %s21, 0
      %p62 = por %p60, %p61
      %s63 = ssub.s32 %s23, %s30
      %p64 = scmp.eq.s32.totalorder %s63, 0
      %s66 = sadd.s32 %s65, 1
      %s67 = scalar_select %p64, %s65, %s66
      %p70 = pneg %p64
      %p71 = scmp.eq.s32.totalorder %s15, 1
      %p72 = por %p70, %p71
      %p73 = scmp.ne.s32.totalorder %s65, %s68
      %p74 = scmp.eq.s32.totalorder %s15, 0
      %p75 = por %p73, %p74
      %p76 = scmp.ne.s32.totalorder %s65, %s68
      %p77 = scmp.eq.s32.totalorder %s20, 1
      %p78 = por %p76, %p77
      %p79 = scmp.ne.s32.totalorder %s68, %s69
      %p80 = scmp.eq.s32.totalorder %s20, 0
      %p81 = por %p79, %p80
      %p82 = scmp.ne.s32.totalorder %s68, %s69
      %p83 = scmp.eq.s32.totalorder %s21, 1
      %p84 = por %p82, %p83
      %p86 = scmp.ne.s32.totalorder %s69, %s85
      %p87 = scmp.eq.s32.totalorder %s21, 0
      %p88 = por %p86, %p87
      %s89 = ssub.s32 %s23, %s30
      %p90 = scmp.eq.s32.totalorder %s89, 0
      %s92 = sadd.s32 %s91, 1
      %s93 = scalar_select %p90, %s91, %s92
      %p96 = pneg %p90
      %p97 = scmp.eq.s32.totalorder %s15, 1
      %p98 = por %p96, %p97
      %p99 = scmp.ne.s32.totalorder %s91, %s94
      %p100 = scmp.eq.s32.totalorder %s15, 0
      %p101 = por %p99, %p100
      %p102 = scmp.ne.s32.totalorder %s91, %s94
      %p103 = scmp.eq.s32.totalorder %s20, 1
      %p104 = por %p102, %p103
      %p105 = scmp.ne.s32.totalorder %s94, %s95
      %p106 = scmp.eq.s32.totalorder %s20, 0
      %p107 = por %p105, %p106
      %p108 = scmp.ne.s32.totalorder %s94, %s95
      %p109 = scmp.eq.s32.totalorder %s21, 1
      %p110 = por %p108, %p109
      %p112 = scmp.ne.s32.totalorder %s95, %s111
      %p113 = scmp.eq.s32.totalorder %s21, 0
      %p114 = por %p112, %p113
      %s115 = ssub.s32 %s22, %s34
      %s116 = ssub.s32 %s23, %s30
      %s117 = sor.u32 %s115, %s116
      %p118 = scmp.eq.s32.totalorder %s117, 0
      %s120 = sadd.s32 %s119, 1
      %s121 = scalar_select %p118, %s119, %s120
      %p124 = pneg %p118
      %p125 = scmp.eq.s32.totalorder %s15, 1
      %p126 = por %p124, %p125
      %p127 = scmp.ne.s32.totalorder %s119, %s122
      %p128 = scmp.eq.s32.totalorder %s15, 0
      %p129 = por %p127, %p128
      %p130 = scmp.ne.s32.totalorder %s119, %s122
      %p131 = scmp.eq.s32.totalorder %s20, 1
      %p132 = por %p130, %p131
      %p133 = scmp.ne.s32.totalorder %s122, %s123
      %p134 = scmp.eq.s32.totalorder %s20, 0
      %p135 = por %p133, %p134
      %p136 = scmp.ne.s32.totalorder %s122, %s123
      %p137 = scmp.eq.s32.totalorder %s21, 1
      %p138 = por %p136, %p137
      %p140 = scmp.ne.s32.totalorder %s123, %s139
      %p141 = scmp.eq.s32.totalorder %s21, 0
      %p142 = por %p140, %p141
      %p143 = scmp.le.s32.totalorder 1, %s15
      %p144 = scmp.lt.s32.totalorder %s15, 3
      %p145 = pnand %p143, %p144
      %p146 = pneg %p145
      // Predicated region
      $region9: #{poscnn_forward.1} parent=5 // pred_check
        _
      $region10: #{poscnn_forward.1} parent=5 // pred_check_branch
        %148 = sbr.rel (%p145) target = $region12
      $region11: #{poscnn_forward.1} parent=5 // pred_region
        %s149 = ssub.s32 %s15, 1
        // Predicated region
        $region13: #{poscnn_forward.1} parent=11 // pred_check
          %p150 = pneg %p81
        $region14: #{poscnn_forward.1} parent=11 // pred_check_branch
          %152 = sbr.rel (%p150) target = $region16
        $region15: #{poscnn_forward.1} parent=11 // pred_region
          %s153 = smul.u32 4, %s25
          %p154 = scmp.lt.s32.totalorder %s153, 3
          %s155 = scalar_select %p154, %s153, 3
          %s156 = smul.addr %s155, 8
          %s157 = scalar_lea.vmem %s1, %s156
          %s158 = smul.u32 4, %s25
        $region16: #{poscnn_forward.1} parent=11 // pred_fallthru
          _
        // Predicated region
        $region17: #{poscnn_forward.1} parent=11 // pred_check
          %p159 = pneg %p107
        $region18: #{poscnn_forward.1} parent=11 // pred_check_branch
          %161 = sbr.rel (%p159) target = $region20
        $region19: #{poscnn_forward.1} parent=11 // pred_region
          %s162 = smul.u32 4, %s25
          %p163 = scmp.lt.s32.totalorder %s162, 3
          %s164 = scalar_select %p163, %s162, 3
          %s165 = scalar_lea.vmem %s2, %s164
          %s166 = smul.u32 4, %s25
        $region20: #{poscnn_forward.1} parent=11 // pred_fallthru
          _
      $region12: #{poscnn_forward.1} parent=5 // pred_fallthru
        _
      %p167 = scmp.lt.s32.totalorder %s15, 2
      // Predicated region
      $region21: #{poscnn_forward.1} parent=5 // pred_check
        %p168 = pneg %p167
      $region22: #{poscnn_forward.1} parent=5 // pred_check_branch
        %170 = sbr.rel (%p168) target = $region24
      $region23: #{poscnn_forward.1} parent=5 // pred_region
        // Predicated region
        $region25: #{poscnn_forward.1} parent=23 // pred_check
          %p171 = pneg %p49
        $region26: #{poscnn_forward.1} parent=23 // pred_check_branch
          %173 = sbr.rel (%p171) target = $region28
        $region27: #{poscnn_forward.1} parent=23 // pred_region
          %s174 = sand.u32 %s39, 1
          %s175 = scalar_lea.sflag [#allocation4], %s174
          %s176 = sand.u32 %s39, 1
          %s177 = smul.addr %s176, 256
          %s178 = scalar_lea.vmem [#allocation3], %s177
          %s179 = smul.u32 4, %s23
          %s181 = ssub.s32 4096, 4096
          %182 = vsyncadd %s175, %s181
          %s183 = smul.addr %s22, 32
          %s184 = sadd.s32 %s179, %s183
          %s185 = smul.addr %s184, 128
          %s186 = scalar_lea.hbm %s0, %s185
          %s187 = sshll.u32 %s178, 4
          %s188 = int_to_ptr.vmem [resolvable:$true] %s187
          %193 = dma.hbm_to_vmem [thread:$0]  %s186, 4096, %s188, %s175, 512, 512, 32
        $region28: #{poscnn_forward.1} parent=23 // pred_fallthru
          _
      $region24: #{poscnn_forward.1} parent=5 // pred_fallthru
        _
      %p194 = scmp.le.s32.totalorder 1, %s15
      %p195 = scmp.lt.s32.totalorder %s15, 3
      %p196 = pnand %p194, %p195
      %p197 = pneg %p196
      // Predicated region
      $region29: #{poscnn_forward.1} parent=5 // pred_check
        _
      $region30: #{poscnn_forward.1} parent=5 // pred_check_branch
        %199 = sbr.rel (%p196) target = $region32
      $region31: #{poscnn_forward.1} parent=5 // pred_region
        %s200 = ssub.s32 %s15, 1
        %s201 = sand.u32 %s42, 1
        %s202 = scalar_lea.sflag [#allocation4], %s201
        %s203 = sand.u32 %s42, 1
        %s204 = smul.addr %s203, 256
        %s205 = scalar_lea.vmem [#allocation3], %s204
        // Predicated region
        $region33: #{poscnn_forward.1} parent=31 // pred_check
          %p206 = pneg %p55
        $region34: #{poscnn_forward.1} parent=31 // pred_check_branch
          %208 = sbr.rel (%p206) target = $region36
        $region35: #{poscnn_forward.1} parent=31 // pred_region
          %209 = dma.done %s202, 4096
        $region36: #{poscnn_forward.1} parent=31 // pred_fallthru
          _
        %s210 = sand.u32 %s42, 1
        %s211 = scalar_lea.sflag [#allocation4], %s210
        %s212 = sand.u32 %s42, 1
        %s213 = smul.addr %s212, 256
        %s214 = scalar_lea.vmem [#allocation3], %s213
        %p215 = pneg %p55
        %p216 = pneg %p52
        %s217 = smul.u32 4, %s25
        %p218 = scmp.lt.s32.totalorder %s217, 3
        %s219 = scalar_select %p218, %s217, 3
        %s220 = smul.addr %s219, 8
        %s221 = scalar_lea.vmem %s1, %s220
        %p222 = pneg %p81
        %p223 = pneg %p78
        %s224 = smul.u32 4, %s25
        %p225 = scmp.lt.s32.totalorder %s224, 3
        %s226 = scalar_select %p225, %s224, 3
        %s227 = scalar_lea.vmem %s2, %s226
        %p228 = pneg %p107
        %p229 = pneg %p104
        %p230 = pneg %p135
        %p231 = pneg %p132
        %s232 = sand.u32 %s122, 1
        %s233 = scalar_lea.sflag [#allocation5], %s232
        %s234 = sand.u32 %s122, 1
        %s235 = smul.addr %s234, 256
        %s236 = scalar_lea.vmem [#allocation6], %s235
        %s237 = smul.u32 4, %s25
        %s238 = smul.u32 4, %s25
        %p239 = scmp.lt.s32.totalorder %s238, 3
        %s240 = scalar_select %p239, %s238, 3
        %s241 = smul.addr %s240, 8
        %s242 = scalar_lea.vmem %s1, %s241
        %s243 = smul.u32 4, %s25
        %s244 = smul.u32 4, %s25
        %p245 = scmp.lt.s32.totalorder %s244, 3
        %s246 = scalar_select %p245, %s244, 3
        %s247 = scalar_lea.vmem %s2, %s246
        %s248 = smul.u32 4, %s25
        %s249 = smul.u32 4, %s25
        %v250 = vld [vmem:[%s205] sm:$0xff]
        %v251 = vld [vmem:[%s205 + $0x8] sm:$0xff]
        %v252 = vld [vmem:[%s205 + $0x10] sm:$0xff]
        %v253 = vld [vmem:[%s205 + $0x18] sm:$0xff]
        %v254 = vld [vmem:[%s205 + $0x20] sm:$0xff]
        %v255 = vld [vmem:[%s205 + $0x28] sm:$0xff]
        %v256 = vld [vmem:[%s205 + $0x30] sm:$0xff]
        %v257 = vld [vmem:[%s205 + $0x38] sm:$0xff]
        %v258 = vld [vmem:[%s205 + $0x40] sm:$0xff]
        %v259 = vld [vmem:[%s205 + $0x48] sm:$0xff]
        %v260 = vld [vmem:[%s205 + $0x50] sm:$0xff]
        %v261 = vld [vmem:[%s205 + $0x58] sm:$0xff]
        %v262 = vld [vmem:[%s205 + $0x60] sm:$0xff]
        %v263 = vld [vmem:[%s205 + $0x68] sm:$0xff]
        %v264 = vld [vmem:[%s205 + $0x70] sm:$0xff]
        %v265 = vld [vmem:[%s205 + $0x78] sm:$0xff]
        %v266 = vld [vmem:[%s205 + $0x80] sm:$0xff]
        %v267 = vld [vmem:[%s205 + $0x88] sm:$0xff]
        %v268 = vld [vmem:[%s205 + $0x90] sm:$0xff]
        %v269 = vld [vmem:[%s205 + $0x98] sm:$0xff]
        %v270 = vld [vmem:[%s205 + $0xa0] sm:$0xff]
        %v271 = vld [vmem:[%s205 + $0xa8] sm:$0xff]
        %v272 = vld [vmem:[%s205 + $0xb0] sm:$0xff]
        %v273 = vld [vmem:[%s205 + $0xb8] sm:$0xff]
        %v274 = vld [vmem:[%s205 + $0xc0] sm:$0xff]
        %v275 = vld [vmem:[%s205 + $0xc8] sm:$0xff]
        %v276 = vld [vmem:[%s205 + $0xd0] sm:$0xff]
        %v277 = vld [vmem:[%s205 + $0xd8] sm:$0xff]
        %v278 = vld [vmem:[%s205 + $0xe0] sm:$0xff]
        %v279 = vld [vmem:[%s205 + $0xe8] sm:$0xff]
        %v280 = vld [vmem:[%s205 + $0xf0] sm:$0xff]
        %v281 = vld [vmem:[%s205 + $0xf8] sm:$0xff]
        %282 = vst [vmem:[#allocation2] sm:$0xff] 0.0
        %283 = vst [vmem:[#allocation2 + $0x8] sm:$0xff] 0.0
        %284 = vst [vmem:[#allocation2 + $0x10] sm:$0xff] 0.0
        %285 = vst [vmem:[#allocation2 + $0x18] sm:$0xff] 0.0
        %286 = vst [vmem:[#allocation2 + $0x20] sm:$0x3] 0.0
        %287 = vst [vmem:[#allocation2 + $0x28] sm:$0x3] 0.0
        %288 = vst [vmem:[#allocation2 + $0x30] sm:$0x3] 0.0
        %289 = vst [vmem:[#allocation2 + $0x38] sm:$0x3] 0.0
        %290 = vst [vmem:[#allocation2 + $0x40] sm:$0xff] 0.0
        %291 = vst [vmem:[#allocation2 + $0x48] sm:$0xff] 0.0
        %292 = vst [vmem:[#allocation2 + $0x50] sm:$0xff] 0.0
        %293 = vst [vmem:[#allocation2 + $0x58] sm:$0xff] 0.0
        %294 = vst [vmem:[#allocation2 + $0x60] sm:$0x3] 0.0
        %295 = vst [vmem:[#allocation2 + $0x68] sm:$0x3] 0.0
        %296 = vst [vmem:[#allocation2 + $0x70] sm:$0x3] 0.0
        %297 = vst [vmem:[#allocation2 + $0x78] sm:$0x3] 0.0
        %298 = vst [vmem:[#allocation2 + $0x80] sm:$0xff] 0.0
        %299 = vst [vmem:[#allocation2 + $0x88] sm:$0xff] 0.0
        %300 = vst [vmem:[#allocation2 + $0x90] sm:$0xff] 0.0
        %301 = vst [vmem:[#allocation2 + $0x98] sm:$0xff] 0.0
        %302 = vst [vmem:[#allocation2 + $0xa0] sm:$0x3] 0.0
        %303 = vst [vmem:[#allocation2 + $0xa8] sm:$0x3] 0.0
        %304 = vst [vmem:[#allocation2 + $0xb0] sm:$0x3] 0.0
        %305 = vst [vmem:[#allocation2 + $0xb8] sm:$0x3] 0.0
        %306 = vst [vmem:[#allocation2 + $0xc0] sm:$0xff] 0.0
        %307 = vst [vmem:[#allocation2 + $0xc8] sm:$0xff] 0.0
        %308 = vst [vmem:[#allocation2 + $0xd0] sm:$0xff] 0.0
        %309 = vst [vmem:[#allocation2 + $0xd8] sm:$0xff] 0.0
        %310 = vst [vmem:[#allocation2 + $0xe0] sm:$0x3] 0.0
        %311 = vst [vmem:[#allocation2 + $0xe8] sm:$0x3] 0.0
        %312 = vst [vmem:[#allocation2 + $0xf0] sm:$0x3] 0.0
        %313 = vst [vmem:[#allocation2 + $0xf8] sm:$0x3] 0.0
        %314 = vst [vmem:[#allocation2 + $0x100] sm:$0xff] 0.0
        %315 = vst [vmem:[#allocation2 + $0x108] sm:$0xff] 0.0
        %316 = vst [vmem:[#allocation2 + $0x110] sm:$0xff] 0.0
        %317 = vst [vmem:[#allocation2 + $0x118] sm:$0xff] 0.0
        %318 = vst [vmem:[#allocation2 + $0x120] sm:$0x3] 0.0
        %319 = vst [vmem:[#allocation2 + $0x128] sm:$0x3] 0.0
        %320 = vst [vmem:[#allocation2 + $0x130] sm:$0x3] 0.0
        %321 = vst [vmem:[#allocation2 + $0x138] sm:$0x3] 0.0
        %322 = vst [vmem:[#allocation2 + $0x140] sm:$0xff] 0.0
        %323 = vst [vmem:[#allocation2 + $0x148] sm:$0xff] 0.0
        %324 = vst [vmem:[#allocation2 + $0x150] sm:$0xff] 0.0
        %325 = vst [vmem:[#allocation2 + $0x158] sm:$0xff] 0.0
        %326 = vst [vmem:[#allocation2 + $0x160] sm:$0x3] 0.0
        %327 = vst [vmem:[#allocation2 + $0x168] sm:$0x3] 0.0
        %328 = vst [vmem:[#allocation2 + $0x170] sm:$0x3] 0.0
        %329 = vst [vmem:[#allocation2 + $0x178] sm:$0x3] 0.0
        %330 = vst [vmem:[#allocation2 + $0x180] sm:$0xff] 0.0
        %331 = vst [vmem:[#allocation2 + $0x188] sm:$0xff] 0.0
        %332 = vst [vmem:[#allocation2 + $0x190] sm:$0xff] 0.0
        %333 = vst [vmem:[#allocation2 + $0x198] sm:$0xff] 0.0
        %334 = vst [vmem:[#allocation2 + $0x1a0] sm:$0x3] 0.0
        %335 = vst [vmem:[#allocation2 + $0x1a8] sm:$0x3] 0.0
        %336 = vst [vmem:[#allocation2 + $0x1b0] sm:$0x3] 0.0
        %337 = vst [vmem:[#allocation2 + $0x1b8] sm:$0x3] 0.0
        %338 = vst [vmem:[#allocation2 + $0x1c0] sm:$0xff] 0.0
        %339 = vst [vmem:[#allocation2 + $0x1c8] sm:$0xff] 0.0
        %340 = vst [vmem:[#allocation2 + $0x1d0] sm:$0xff] 0.0
        %341 = vst [vmem:[#allocation2 + $0x1d8] sm:$0xff] 0.0
        %342 = vst [vmem:[#allocation2 + $0x1e0] sm:$0x3] 0.0
        %343 = vst [vmem:[#allocation2 + $0x1e8] sm:$0x3] 0.0
        %344 = vst [vmem:[#allocation2 + $0x1f0] sm:$0x3] 0.0
        %345 = vst [vmem:[#allocation2 + $0x1f8] sm:$0x3] 0.0
        %346 = vst [vmem:[#allocation2 + $0x200] sm:$0xff] 0.0
        %347 = vst [vmem:[#allocation2 + $0x208] sm:$0xff] 0.0
        %348 = vst [vmem:[#allocation2 + $0x210] sm:$0xff] 0.0
        %349 = vst [vmem:[#allocation2 + $0x218] sm:$0xff] 0.0
        %350 = vst [vmem:[#allocation2 + $0x220] sm:$0x3] 0.0
        %351 = vst [vmem:[#allocation2 + $0x228] sm:$0x3] 0.0
        %352 = vst [vmem:[#allocation2 + $0x230] sm:$0x3] 0.0
        %353 = vst [vmem:[#allocation2 + $0x238] sm:$0x3] 0.0
        %354 = vst [vmem:[#allocation2 + $0x240] sm:$0xff] 0.0
        %355 = vst [vmem:[#allocation2 + $0x248] sm:$0xff] 0.0
        %356 = vst [vmem:[#allocation2 + $0x250] sm:$0xff] 0.0
        %357 = vst [vmem:[#allocation2 + $0x258] sm:$0xff] 0.0
        %358 = vst [vmem:[#allocation2 + $0x260] sm:$0x3] 0.0
        %359 = vst [vmem:[#allocation2 + $0x268] sm:$0x3] 0.0
        %360 = vst [vmem:[#allocation2 + $0x270] sm:$0x3] 0.0
        %361 = vst [vmem:[#allocation2 + $0x278] sm:$0x3] 0.0
        %v394 = vrot.slane %v250, 7
        %v395 = vrot.slane %v251, 7
        %v396 = vrot.slane %v252, 7
        %v397 = vrot.slane %v253, 7
        %v398 = vrot.slane %v254, 7
        %v399 = vrot.slane %v255, 7
        %v400 = vrot.slane %v256, 7
        %v401 = vrot.slane %v257, 7
        %v402 = vrot.slane %v258, 7
        %v403 = vrot.slane %v259, 7
        %v404 = vrot.slane %v260, 7
        %v405 = vrot.slane %v261, 7
        %v406 = vrot.slane %v262, 7
        %v407 = vrot.slane %v263, 7
        %v408 = vrot.slane %v264, 7
        %v409 = vrot.slane %v265, 7
        %v410 = vrot.slane %v266, 7
        %v411 = vrot.slane %v267, 7
        %v412 = vrot.slane %v268, 7
        %v413 = vrot.slane %v269, 7
        %v414 = vrot.slane %v270, 7
        %v415 = vrot.slane %v271, 7
        %v416 = vrot.slane %v272, 7
        %v417 = vrot.slane %v273, 7
        %v418 = vrot.slane %v274, 7
        %v419 = vrot.slane %v275, 7
        %v420 = vrot.slane %v276, 7
        %v421 = vrot.slane %v277, 7
        %v422 = vrot.slane %v278, 7
        %v423 = vrot.slane %v279, 7
        %v424 = vrot.slane %v280, 7
        %v425 = vrot.slane %v281, 7
        %s458 = scalar_lea.vmem [#allocation2], 64
        %459 = vst [vmem:[%s458] sm:$0xfe] %v394
        %460 = vst [vmem:[%s458 + $0x8] sm:$0xfe] %v395
        %461 = vst [vmem:[%s458 + $0x10] sm:$0xfe] %v396
        %462 = vst [vmem:[%s458 + $0x18] sm:$0xfe] %v397
        %463 = vst [vmem:[%s458 + $0x20] sm:$0x1] %v394
        %464 = vst [vmem:[%s458 + $0x28] sm:$0x1] %v395
        %465 = vst [vmem:[%s458 + $0x30] sm:$0x1] %v396
        %466 = vst [vmem:[%s458 + $0x38] sm:$0x1] %v397
        %467 = vst [vmem:[%s458 + $0x40] sm:$0xfe] %v398
        %468 = vst [vmem:[%s458 + $0x48] sm:$0xfe] %v399
        %469 = vst [vmem:[%s458 + $0x50] sm:$0xfe] %v400
        %470 = vst [vmem:[%s458 + $0x58] sm:$0xfe] %v401
        %471 = vst [vmem:[%s458 + $0x60] sm:$0x1] %v398
        %472 = vst [vmem:[%s458 + $0x68] sm:$0x1] %v399
        %473 = vst [vmem:[%s458 + $0x70] sm:$0x1] %v400
        %474 = vst [vmem:[%s458 + $0x78] sm:$0x1] %v401
        %475 = vst [vmem:[%s458 + $0x80] sm:$0xfe] %v402
        %476 = vst [vmem:[%s458 + $0x88] sm:$0xfe] %v403
        %477 = vst [vmem:[%s458 + $0x90] sm:$0xfe] %v404
        %478 = vst [vmem:[%s458 + $0x98] sm:$0xfe] %v405
        %479 = vst [vmem:[%s458 + $0xa0] sm:$0x1] %v402
        %480 = vst [vmem:[%s458 + $0xa8] sm:$0x1] %v403
        %481 = vst [vmem:[%s458 + $0xb0] sm:$0x1] %v404
        %482 = vst [vmem:[%s458 + $0xb8] sm:$0x1] %v405
        %483 = vst [vmem:[%s458 + $0xc0] sm:$0xfe] %v406
        %484 = vst [vmem:[%s458 + $0xc8] sm:$0xfe] %v407
        %485 = vst [vmem:[%s458 + $0xd0] sm:$0xfe] %v408
        %486 = vst [vmem:[%s458 + $0xd8] sm:$0xfe] %v409
        %487 = vst [vmem:[%s458 + $0xe0] sm:$0x1] %v406
        %488 = vst [vmem:[%s458 + $0xe8] sm:$0x1] %v407
        %489 = vst [vmem:[%s458 + $0xf0] sm:$0x1] %v408
        %490 = vst [vmem:[%s458 + $0xf8] sm:$0x1] %v409
        %491 = vst [vmem:[%s458 + $0x100] sm:$0xfe] %v410
        %492 = vst [vmem:[%s458 + $0x108] sm:$0xfe] %v411
        %493 = vst [vmem:[%s458 + $0x110] sm:$0xfe] %v412
        %494 = vst [vmem:[%s458 + $0x118] sm:$0xfe] %v413
        %495 = vst [vmem:[%s458 + $0x120] sm:$0x1] %v410
        %496 = vst [vmem:[%s458 + $0x128] sm:$0x1] %v411
        %497 = vst [vmem:[%s458 + $0x130] sm:$0x1] %v412
        %498 = vst [vmem:[%s458 + $0x138] sm:$0x1] %v413
        %499 = vst [vmem:[%s458 + $0x140] sm:$0xfe] %v414
        %500 = vst [vmem:[%s458 + $0x148] sm:$0xfe] %v415
        %501 = vst [vmem:[%s458 + $0x150] sm:$0xfe] %v416
        %502 = vst [vmem:[%s458 + $0x158] sm:$0xfe] %v417
        %503 = vst [vmem:[%s458 + $0x160] sm:$0x1] %v414
        %504 = vst [vmem:[%s458 + $0x168] sm:$0x1] %v415
        %505 = vst [vmem:[%s458 + $0x170] sm:$0x1] %v416
        %506 = vst [vmem:[%s458 + $0x178] sm:$0x1] %v417
        %507 = vst [vmem:[%s458 + $0x180] sm:$0xfe] %v418
        %508 = vst [vmem:[%s458 + $0x188] sm:$0xfe] %v419
        %509 = vst [vmem:[%s458 + $0x190] sm:$0xfe] %v420
        %510 = vst [vmem:[%s458 + $0x198] sm:$0xfe] %v421
        %511 = vst [vmem:[%s458 + $0x1a0] sm:$0x1] %v418
        %512 = vst [vmem:[%s458 + $0x1a8] sm:$0x1] %v419
        %513 = vst [vmem:[%s458 + $0x1b0] sm:$0x1] %v420
        %514 = vst [vmem:[%s458 + $0x1b8] sm:$0x1] %v421
        %515 = vst [vmem:[%s458 + $0x1c0] sm:$0xfe] %v422
        %516 = vst [vmem:[%s458 + $0x1c8] sm:$0xfe] %v423
        %517 = vst [vmem:[%s458 + $0x1d0] sm:$0xfe] %v424
        %518 = vst [vmem:[%s458 + $0x1d8] sm:$0xfe] %v425
        %519 = vst [vmem:[%s458 + $0x1e0] sm:$0x1] %v422
        %520 = vst [vmem:[%s458 + $0x1e8] sm:$0x1] %v423
        %521 = vst [vmem:[%s458 + $0x1f0] sm:$0x1] %v424
        %522 = vst [vmem:[%s458 + $0x1f8] sm:$0x1] %v425
        %v523 = vld [vmem:[%s242] sm:$0xff]
        %v524 = vld [vmem:[%s242 + $0x8] sm:$0xff]
        %v525 = vld [vmem:[%s242 + $0x10] sm:$0xff]
        %v526 = vld [vmem:[%s242 + $0x18] sm:$0xff]
        %v527 = vld [vmem:[%s242 + $0x20] sm:$0x1]
        %v528 = vld [vmem:[%s242 + $0x28] sm:$0x1]
        %v529 = vld [vmem:[%s242 + $0x30] sm:$0x1]
        %v530 = vld [vmem:[%s242 + $0x38] sm:$0x1]
        %v531 = vld [vmem:[%s247] sm:$0xf]
        %v533 = vlaneseq
        %v534 = vshrl.u32 %v533, 7
        %v535 = vsub.s32 0, %v534
        %v536 = vrot.slane %v531, %v535
        %v537 = vlaneseq
        %v538 = vshrl.u32 %v537, 7
        %v539 = vsub.s32 1, %v538
        %v540 = vrot.slane %v531, %v539
        %v541 = vlaneseq
        %v542 = vshrl.u32 %v541, 7
        %v543 = vsub.s32 2, %v542
        %v544 = vrot.slane %v531, %v543
        %v545 = vlaneseq
        %v546 = vshrl.u32 %v545, 7
        %v547 = vsub.s32 3, %v546
        %v548 = vrot.slane %v531, %v547
        %v553 = vadd.f32 %v250, %v536
        %v554 = vadd.f32 %v251, %v540
        %v555 = vadd.f32 %v252, %v544
        %v556 = vadd.f32 %v253, %v548
        %v557 = vadd.f32 %v254, %v536
        %v558 = vadd.f32 %v255, %v540
        %v559 = vadd.f32 %v256, %v544
        %v560 = vadd.f32 %v257, %v548
        %v561 = vadd.f32 %v258, %v536
        %v562 = vadd.f32 %v259, %v540
        %v563 = vadd.f32 %v260, %v544
        %v564 = vadd.f32 %v261, %v548
        %v565 = vadd.f32 %v262, %v536
        %v566 = vadd.f32 %v263, %v540
        %v567 = vadd.f32 %v264, %v544
        %v568 = vadd.f32 %v265, %v548
        %v569 = vadd.f32 %v266, %v536
        %v570 = vadd.f32 %v267, %v540
        %v571 = vadd.f32 %v268, %v544
        %v572 = vadd.f32 %v269, %v548
        %v573 = vadd.f32 %v270, %v536
        %v574 = vadd.f32 %v271, %v540
        %v575 = vadd.f32 %v272, %v544
        %v576 = vadd.f32 %v273, %v548
        %v577 = vadd.f32 %v274, %v536
        %v578 = vadd.f32 %v275, %v540
        %v579 = vadd.f32 %v276, %v544
        %v580 = vadd.f32 %v277, %v548
        %v581 = vadd.f32 %v278, %v536
        %v582 = vadd.f32 %v279, %v540
        %v583 = vadd.f32 %v280, %v544
        %v584 = vadd.f32 %v281, %v548
        %v585 = vld [vmem:[#allocation2] sm:$0xff]
        %v586 = vld [vmem:[#allocation2 + $0x8] sm:$0xff]
        %v587 = vld [vmem:[#allocation2 + $0x10] sm:$0xff]
        %v588 = vld [vmem:[#allocation2 + $0x18] sm:$0xff]
        %v589 = vld [vmem:[#allocation2 + $0x40] sm:$0xff]
        %v590 = vld [vmem:[#allocation2 + $0x48] sm:$0xff]
        %v591 = vld [vmem:[#allocation2 + $0x50] sm:$0xff]
        %v592 = vld [vmem:[#allocation2 + $0x58] sm:$0xff]
        %v593 = vld [vmem:[#allocation2 + $0x80] sm:$0xff]
        %v594 = vld [vmem:[#allocation2 + $0x88] sm:$0xff]
        %v595 = vld [vmem:[#allocation2 + $0x90] sm:$0xff]
        %v596 = vld [vmem:[#allocation2 + $0x98] sm:$0xff]
        %v597 = vld [vmem:[#allocation2 + $0xc0] sm:$0xff]
        %v598 = vld [vmem:[#allocation2 + $0xc8] sm:$0xff]
        %v599 = vld [vmem:[#allocation2 + $0xd0] sm:$0xff]
        %v600 = vld [vmem:[#allocation2 + $0xd8] sm:$0xff]
        %v601 = vld [vmem:[#allocation2 + $0x100] sm:$0xff]
        %v602 = vld [vmem:[#allocation2 + $0x108] sm:$0xff]
        %v603 = vld [vmem:[#allocation2 + $0x110] sm:$0xff]
        %v604 = vld [vmem:[#allocation2 + $0x118] sm:$0xff]
        %v605 = vld [vmem:[#allocation2 + $0x140] sm:$0xff]
        %v606 = vld [vmem:[#allocation2 + $0x148] sm:$0xff]
        %v607 = vld [vmem:[#allocation2 + $0x150] sm:$0xff]
        %v608 = vld [vmem:[#allocation2 + $0x158] sm:$0xff]
        %v609 = vld [vmem:[#allocation2 + $0x180] sm:$0xff]
        %v610 = vld [vmem:[#allocation2 + $0x188] sm:$0xff]
        %v611 = vld [vmem:[#allocation2 + $0x190] sm:$0xff]
        %v612 = vld [vmem:[#allocation2 + $0x198] sm:$0xff]
        %v613 = vld [vmem:[#allocation2 + $0x1c0] sm:$0xff]
        %v614 = vld [vmem:[#allocation2 + $0x1c8] sm:$0xff]
        %v615 = vld [vmem:[#allocation2 + $0x1d0] sm:$0xff]
        %v616 = vld [vmem:[#allocation2 + $0x1d8] sm:$0xff]
        %v617 = vld [vmem:[#allocation2 + $0x200] sm:$0xff]
        %v618 = vld [vmem:[#allocation2 + $0x208] sm:$0xff]
        %v619 = vld [vmem:[#allocation2 + $0x210] sm:$0xff]
        %v620 = vld [vmem:[#allocation2 + $0x218] sm:$0xff]
        %v621 = vld [vmem:[#allocation2 + $0x240] sm:$0xff]
        %v622 = vld [vmem:[#allocation2 + $0x248] sm:$0xff]
        %v623 = vld [vmem:[#allocation2 + $0x250] sm:$0xff]
        %v624 = vld [vmem:[#allocation2 + $0x258] sm:$0xff]
        %v625 = vlaneseq
        %v626 = vshrl.u32 %v625, 7
        %v627 = vsub.s32 0, %v626
        %v628 = vrot.slane %v523, %v627
        %v629 = vlaneseq
        %v630 = vshrl.u32 %v629, 7
        %v631 = vsub.s32 0, %v630
        %v632 = vrot.slane %v524, %v631
        %v633 = vlaneseq
        %v634 = vshrl.u32 %v633, 7
        %v635 = vsub.s32 0, %v634
        %v636 = vrot.slane %v525, %v635
        %v637 = vlaneseq
        %v638 = vshrl.u32 %v637, 7
        %v639 = vsub.s32 0, %v638
        %v640 = vrot.slane %v526, %v639
        %v641 = vmul.f32 %v585, %v628
        %v642 = vmul.f32 %v586, %v632
        %v643 = vmul.f32 %v587, %v636
        %v644 = vmul.f32 %v588, %v640
        %v645 = vmul.f32 %v589, %v628
        %v646 = vmul.f32 %v590, %v632
        %v647 = vmul.f32 %v591, %v636
        %v648 = vmul.f32 %v592, %v640
        %v649 = vmul.f32 %v593, %v628
        %v650 = vmul.f32 %v594, %v632
        %v651 = vmul.f32 %v595, %v636
        %v652 = vmul.f32 %v596, %v640
        %v653 = vmul.f32 %v597, %v628
        %v654 = vmul.f32 %v598, %v632
        %v655 = vmul.f32 %v599, %v636
        %v656 = vmul.f32 %v600, %v640
        %v657 = vmul.f32 %v601, %v628
        %v658 = vmul.f32 %v602, %v632
        %v659 = vmul.f32 %v603, %v636
        %v660 = vmul.f32 %v604, %v640
        %v661 = vmul.f32 %v605, %v628
        %v662 = vmul.f32 %v606, %v632
        %v663 = vmul.f32 %v607, %v636
        %v664 = vmul.f32 %v608, %v640
        %v665 = vmul.f32 %v609, %v628
        %v666 = vmul.f32 %v610, %v632
        %v667 = vmul.f32 %v611, %v636
        %v668 = vmul.f32 %v612, %v640
        %v669 = vmul.f32 %v613, %v628
        %v670 = vmul.f32 %v614, %v632
        %v671 = vmul.f32 %v615, %v636
        %v672 = vmul.f32 %v616, %v640
        %v673 = vadd.f32 %v553, %v641
        %v674 = vadd.f32 %v554, %v642
        %v675 = vadd.f32 %v555, %v643
        %v676 = vadd.f32 %v556, %v644
        %v677 = vadd.f32 %v557, %v645
        %v678 = vadd.f32 %v558, %v646
        %v679 = vadd.f32 %v559, %v647
        %v680 = vadd.f32 %v560, %v648
        %v681 = vadd.f32 %v561, %v649
        %v682 = vadd.f32 %v562, %v650
        %v683 = vadd.f32 %v563, %v651
        %v684 = vadd.f32 %v564, %v652
        %v685 = vadd.f32 %v565, %v653
        %v686 = vadd.f32 %v566, %v654
        %v687 = vadd.f32 %v567, %v655
        %v688 = vadd.f32 %v568, %v656
        %v689 = vadd.f32 %v569, %v657
        %v690 = vadd.f32 %v570, %v658
        %v691 = vadd.f32 %v571, %v659
        %v692 = vadd.f32 %v572, %v660
        %v693 = vadd.f32 %v573, %v661
        %v694 = vadd.f32 %v574, %v662
        %v695 = vadd.f32 %v575, %v663
        %v696 = vadd.f32 %v576, %v664
        %v697 = vadd.f32 %v577, %v665
        %v698 = vadd.f32 %v578, %v666
        %v699 = vadd.f32 %v579, %v667
        %v700 = vadd.f32 %v580, %v668
        %v701 = vadd.f32 %v581, %v669
        %v702 = vadd.f32 %v582, %v670
        %v703 = vadd.f32 %v583, %v671
        %v704 = vadd.f32 %v584, %v672
        %v705 = vlaneseq
        %v706 = vshrl.u32 %v705, 7
        %v707 = vsub.s32 3, %v706
        %v708 = vrot.slane %v523, %v707
        %v709 = vlaneseq
        %v710 = vshrl.u32 %v709, 7
        %v711 = vsub.s32 3, %v710
        %v712 = vrot.slane %v524, %v711
        %v713 = vlaneseq
        %v714 = vshrl.u32 %v713, 7
        %v715 = vsub.s32 3, %v714
        %v716 = vrot.slane %v525, %v715
        %v717 = vlaneseq
        %v718 = vshrl.u32 %v717, 7
        %v719 = vsub.s32 3, %v718
        %v720 = vrot.slane %v526, %v719
        %v721 = vmul.f32 %v589, %v708
        %v722 = vmul.f32 %v590, %v712
        %v723 = vmul.f32 %v591, %v716
        %v724 = vmul.f32 %v592, %v720
        %v725 = vmul.f32 %v593, %v708
        %v726 = vmul.f32 %v594, %v712
        %v727 = vmul.f32 %v595, %v716
        %v728 = vmul.f32 %v596, %v720
        %v729 = vmul.f32 %v597, %v708
        %v730 = vmul.f32 %v598, %v712
        %v731 = vmul.f32 %v599, %v716
        %v732 = vmul.f32 %v600, %v720
        %v733 = vmul.f32 %v601, %v708
        %v734 = vmul.f32 %v602, %v712
        %v735 = vmul.f32 %v603, %v716
        %v736 = vmul.f32 %v604, %v720
        %v737 = vmul.f32 %v605, %v708
        %v738 = vmul.f32 %v606, %v712
        %v739 = vmul.f32 %v607, %v716
        %v740 = vmul.f32 %v608, %v720
        %v741 = vmul.f32 %v609, %v708
        %v742 = vmul.f32 %v610, %v712
        %v743 = vmul.f32 %v611, %v716
        %v744 = vmul.f32 %v612, %v720
        %v745 = vmul.f32 %v613, %v708
        %v746 = vmul.f32 %v614, %v712
        %v747 = vmul.f32 %v615, %v716
        %v748 = vmul.f32 %v616, %v720
        %v749 = vmul.f32 %v617, %v708
        %v750 = vmul.f32 %v618, %v712
        %v751 = vmul.f32 %v619, %v716
        %v752 = vmul.f32 %v620, %v720
        %v753 = vadd.f32 %v673, %v721
        %v754 = vadd.f32 %v674, %v722
        %v755 = vadd.f32 %v675, %v723
        %v756 = vadd.f32 %v676, %v724
        %v757 = vadd.f32 %v677, %v725
        %v758 = vadd.f32 %v678, %v726
        %v759 = vadd.f32 %v679, %v727
        %v760 = vadd.f32 %v680, %v728
        %v761 = vadd.f32 %v681, %v729
        %v762 = vadd.f32 %v682, %v730
        %v763 = vadd.f32 %v683, %v731
        %v764 = vadd.f32 %v684, %v732
        %v765 = vadd.f32 %v685, %v733
        %v766 = vadd.f32 %v686, %v734
        %v767 = vadd.f32 %v687, %v735
        %v768 = vadd.f32 %v688, %v736
        %v769 = vadd.f32 %v689, %v737
        %v770 = vadd.f32 %v690, %v738
        %v771 = vadd.f32 %v691, %v739
        %v772 = vadd.f32 %v692, %v740
        %v773 = vadd.f32 %v693, %v741
        %v774 = vadd.f32 %v694, %v742
        %v775 = vadd.f32 %v695, %v743
        %v776 = vadd.f32 %v696, %v744
        %v777 = vadd.f32 %v697, %v745
        %v778 = vadd.f32 %v698, %v746
        %v779 = vadd.f32 %v699, %v747
        %v780 = vadd.f32 %v700, %v748
        %v781 = vadd.f32 %v701, %v749
        %v782 = vadd.f32 %v702, %v750
        %v783 = vadd.f32 %v703, %v751
        %v784 = vadd.f32 %v704, %v752
        %v785 = vlaneseq
        %v786 = vshrl.u32 %v785, 7
        %v787 = vsub.s32 6, %v786
        %v788 = vrot.slane %v523, %v787
        %v789 = vlaneseq
        %v790 = vshrl.u32 %v789, 7
        %v791 = vsub.s32 6, %v790
        %v792 = vrot.slane %v524, %v791
        %v793 = vlaneseq
        %v794 = vshrl.u32 %v793, 7
        %v795 = vsub.s32 6, %v794
        %v796 = vrot.slane %v525, %v795
        %v797 = vlaneseq
        %v798 = vshrl.u32 %v797, 7
        %v799 = vsub.s32 6, %v798
        %v800 = vrot.slane %v526, %v799
        %v801 = vmul.f32 %v593, %v788
        %v802 = vmul.f32 %v594, %v792
        %v803 = vmul.f32 %v595, %v796
        %v804 = vmul.f32 %v596, %v800
        %v805 = vmul.f32 %v597, %v788
        %v806 = vmul.f32 %v598, %v792
        %v807 = vmul.f32 %v599, %v796
        %v808 = vmul.f32 %v600, %v800
        %v809 = vmul.f32 %v601, %v788
        %v810 = vmul.f32 %v602, %v792
        %v811 = vmul.f32 %v603, %v796
        %v812 = vmul.f32 %v604, %v800
        %v813 = vmul.f32 %v605, %v788
        %v814 = vmul.f32 %v606, %v792
        %v815 = vmul.f32 %v607, %v796
        %v816 = vmul.f32 %v608, %v800
        %v817 = vmul.f32 %v609, %v788
        %v818 = vmul.f32 %v610, %v792
        %v819 = vmul.f32 %v611, %v796
        %v820 = vmul.f32 %v612, %v800
        %v821 = vmul.f32 %v613, %v788
        %v822 = vmul.f32 %v614, %v792
        %v823 = vmul.f32 %v615, %v796
        %v824 = vmul.f32 %v616, %v800
        %v825 = vmul.f32 %v617, %v788
        %v826 = vmul.f32 %v618, %v792
        %v827 = vmul.f32 %v619, %v796
        %v828 = vmul.f32 %v620, %v800
        %v829 = vmul.f32 %v621, %v788
        %v830 = vmul.f32 %v622, %v792
        %v831 = vmul.f32 %v623, %v796
        %v832 = vmul.f32 %v624, %v800
        %v833 = vadd.f32 %v753, %v801
        %v834 = vadd.f32 %v754, %v802
        %v835 = vadd.f32 %v755, %v803
        %v836 = vadd.f32 %v756, %v804
        %v837 = vadd.f32 %v757, %v805
        %v838 = vadd.f32 %v758, %v806
        %v839 = vadd.f32 %v759, %v807
        %v840 = vadd.f32 %v760, %v808
        %v841 = vadd.f32 %v761, %v809
        %v842 = vadd.f32 %v762, %v810
        %v843 = vadd.f32 %v763, %v811
        %v844 = vadd.f32 %v764, %v812
        %v845 = vadd.f32 %v765, %v813
        %v846 = vadd.f32 %v766, %v814
        %v847 = vadd.f32 %v767, %v815
        %v848 = vadd.f32 %v768, %v816
        %v849 = vadd.f32 %v769, %v817
        %v850 = vadd.f32 %v770, %v818
        %v851 = vadd.f32 %v771, %v819
        %v852 = vadd.f32 %v772, %v820
        %v853 = vadd.f32 %v773, %v821
        %v854 = vadd.f32 %v774, %v822
        %v855 = vadd.f32 %v775, %v823
        %v856 = vadd.f32 %v776, %v824
        %v857 = vadd.f32 %v777, %v825
        %v858 = vadd.f32 %v778, %v826
        %v859 = vadd.f32 %v779, %v827
        %v860 = vadd.f32 %v780, %v828
        %v861 = vadd.f32 %v781, %v829
        %v862 = vadd.f32 %v782, %v830
        %v863 = vadd.f32 %v783, %v831
        %v864 = vadd.f32 %v784, %v832
        %v865 = vld [vmem:[#allocation2] sm:$0xfe]
        %v866 = vld [vmem:[#allocation2 + $0x8] sm:$0xfe]
        %v867 = vld [vmem:[#allocation2 + $0x10] sm:$0xfe]
        %v868 = vld [vmem:[#allocation2 + $0x18] sm:$0xfe]
        %v869 = vld [vmem:[#allocation2 + $0x20] sm:$0x1]
        %v870 = vld [vmem:[#allocation2 + $0x28] sm:$0x1]
        %v871 = vld [vmem:[#allocation2 + $0x30] sm:$0x1]
        %v872 = vld [vmem:[#allocation2 + $0x38] sm:$0x1]
        %v873 = vld [vmem:[#allocation2 + $0x40] sm:$0xfe]
        %v874 = vld [vmem:[#allocation2 + $0x48] sm:$0xfe]
        %v875 = vld [vmem:[#allocation2 + $0x50] sm:$0xfe]
        %v876 = vld [vmem:[#allocation2 + $0x58] sm:$0xfe]
        %v877 = vld [vmem:[#allocation2 + $0x60] sm:$0x1]
        %v878 = vld [vmem:[#allocation2 + $0x68] sm:$0x1]
        %v879 = vld [vmem:[#allocation2 + $0x70] sm:$0x1]
        %v880 = vld [vmem:[#allocation2 + $0x78] sm:$0x1]
        %v881 = vld [vmem:[#allocation2 + $0x80] sm:$0xfe]
        %v882 = vld [vmem:[#allocation2 + $0x88] sm:$0xfe]
        %v883 = vld [vmem:[#allocation2 + $0x90] sm:$0xfe]
        %v884 = vld [vmem:[#allocation2 + $0x98] sm:$0xfe]
        %v885 = vld [vmem:[#allocation2 + $0xa0] sm:$0x1]
        %v886 = vld [vmem:[#allocation2 + $0xa8] sm:$0x1]
        %v887 = vld [vmem:[#allocation2 + $0xb0] sm:$0x1]
        %v888 = vld [vmem:[#allocation2 + $0xb8] sm:$0x1]
        %v889 = vld [vmem:[#allocation2 + $0xc0] sm:$0xfe]
        %v890 = vld [vmem:[#allocation2 + $0xc8] sm:$0xfe]
        %v891 = vld [vmem:[#allocation2 + $0xd0] sm:$0xfe]
        %v892 = vld [vmem:[#allocation2 + $0xd8] sm:$0xfe]
        %v893 = vld [vmem:[#allocation2 + $0xe0] sm:$0x1]
        %v894 = vld [vmem:[#allocation2 + $0xe8] sm:$0x1]
        %v895 = vld [vmem:[#allocation2 + $0xf0] sm:$0x1]
        %v896 = vld [vmem:[#allocation2 + $0xf8] sm:$0x1]
        %v897 = vld [vmem:[#allocation2 + $0x100] sm:$0xfe]
        %v898 = vld [vmem:[#allocation2 + $0x108] sm:$0xfe]
        %v899 = vld [vmem:[#allocation2 + $0x110] sm:$0xfe]
        %v900 = vld [vmem:[#allocation2 + $0x118] sm:$0xfe]
        %v901 = vld [vmem:[#allocation2 + $0x120] sm:$0x1]
        %v902 = vld [vmem:[#allocation2 + $0x128] sm:$0x1]
        %v903 = vld [vmem:[#allocation2 + $0x130] sm:$0x1]
        %v904 = vld [vmem:[#allocation2 + $0x138] sm:$0x1]
        %v905 = vld [vmem:[#allocation2 + $0x140] sm:$0xfe]
        %v906 = vld [vmem:[#allocation2 + $0x148] sm:$0xfe]
        %v907 = vld [vmem:[#allocation2 + $0x150] sm:$0xfe]
        %v908 = vld [vmem:[#allocation2 + $0x158] sm:$0xfe]
        %v909 = vld [vmem:[#allocation2 + $0x160] sm:$0x1]
        %v910 = vld [vmem:[#allocation2 + $0x168] sm:$0x1]
        %v911 = vld [vmem:[#allocation2 + $0x170] sm:$0x1]
        %v912 = vld [vmem:[#allocation2 + $0x178] sm:$0x1]
        %v913 = vld [vmem:[#allocation2 + $0x180] sm:$0xfe]
        %v914 = vld [vmem:[#allocation2 + $0x188] sm:$0xfe]
        %v915 = vld [vmem:[#allocation2 + $0x190] sm:$0xfe]
        %v916 = vld [vmem:[#allocation2 + $0x198] sm:$0xfe]
        %v917 = vld [vmem:[#allocation2 + $0x1a0] sm:$0x1]
        %v918 = vld [vmem:[#allocation2 + $0x1a8] sm:$0x1]
        %v919 = vld [vmem:[#allocation2 + $0x1b0] sm:$0x1]
        %v920 = vld [vmem:[#allocation2 + $0x1b8] sm:$0x1]
        %v921 = vld [vmem:[#allocation2 + $0x1c0] sm:$0xfe]
        %v922 = vld [vmem:[#allocation2 + $0x1c8] sm:$0xfe]
        %v923 = vld [vmem:[#allocation2 + $0x1d0] sm:$0xfe]
        %v924 = vld [vmem:[#allocation2 + $0x1d8] sm:$0xfe]
        %v925 = vld [vmem:[#allocation2 + $0x1e0] sm:$0x1]
        %v926 = vld [vmem:[#allocation2 + $0x1e8] sm:$0x1]
        %v927 = vld [vmem:[#allocation2 + $0x1f0] sm:$0x1]
        %v928 = vld [vmem:[#allocation2 + $0x1f8] sm:$0x1]
        %v929 = vld [vmem:[#allocation2 + $0x200] sm:$0xfe]
        %v930 = vld [vmem:[#allocation2 + $0x208] sm:$0xfe]
        %v931 = vld [vmem:[#allocation2 + $0x210] sm:$0xfe]
        %v932 = vld [vmem:[#allocation2 + $0x218] sm:$0xfe]
        %v933 = vld [vmem:[#allocation2 + $0x220] sm:$0x1]
        %v934 = vld [vmem:[#allocation2 + $0x228] sm:$0x1]
        %v935 = vld [vmem:[#allocation2 + $0x230] sm:$0x1]
        %v936 = vld [vmem:[#allocation2 + $0x238] sm:$0x1]
        %v937 = vld [vmem:[#allocation2 + $0x240] sm:$0xfe]
        %v938 = vld [vmem:[#allocation2 + $0x248] sm:$0xfe]
        %v939 = vld [vmem:[#allocation2 + $0x250] sm:$0xfe]
        %v940 = vld [vmem:[#allocation2 + $0x258] sm:$0xfe]
        %v941 = vld [vmem:[#allocation2 + $0x260] sm:$0x1]
        %v942 = vld [vmem:[#allocation2 + $0x268] sm:$0x1]
        %v943 = vld [vmem:[#allocation2 + $0x270] sm:$0x1]
        %v944 = vld [vmem:[#allocation2 + $0x278] sm:$0x1]
        %v945 = vlaneseq
        %v946 = vshrl.u32 %v945, 7
        %v947 = vsub.s32 1, %v946
        %v948 = vrot.slane %v523, %v947
        %v949 = vlaneseq
        %v950 = vshrl.u32 %v949, 7
        %v951 = vsub.s32 1, %v950
        %v952 = vrot.slane %v524, %v951
        %v953 = vlaneseq
        %v954 = vshrl.u32 %v953, 7
        %v955 = vsub.s32 1, %v954
        %v956 = vrot.slane %v525, %v955
        %v957 = vlaneseq
        %v958 = vshrl.u32 %v957, 7
        %v959 = vsub.s32 1, %v958
        %v960 = vrot.slane %v526, %v959
        %v961 = vmul.f32 %v865, %v948
        %v962 = vmul.f32 %v866, %v952
        %v963 = vmul.f32 %v867, %v956
        %v964 = vmul.f32 %v868, %v960
        %v965 = vmul.f32 %v869, %v948
        %v966 = vmul.f32 %v870, %v952
        %v967 = vmul.f32 %v871, %v956
        %v968 = vmul.f32 %v872, %v960
        %v969 = vmul.f32 %v873, %v948
        %v970 = vmul.f32 %v874, %v952
        %v971 = vmul.f32 %v875, %v956
        %v972 = vmul.f32 %v876, %v960
        %v973 = vmul.f32 %v877, %v948
        %v974 = vmul.f32 %v878, %v952
        %v975 = vmul.f32 %v879, %v956
        %v976 = vmul.f32 %v880, %v960
        %v977 = vmul.f32 %v881, %v948
        %v978 = vmul.f32 %v882, %v952
        %v979 = vmul.f32 %v883, %v956
        %v980 = vmul.f32 %v884, %v960
        %v981 = vmul.f32 %v885, %v948
        %v982 = vmul.f32 %v886, %v952
        %v983 = vmul.f32 %v887, %v956
        %v984 = vmul.f32 %v888, %v960
        %v985 = vmul.f32 %v889, %v948
        %v986 = vmul.f32 %v890, %v952
        %v987 = vmul.f32 %v891, %v956
        %v988 = vmul.f32 %v892, %v960
        %v989 = vmul.f32 %v893, %v948
        %v990 = vmul.f32 %v894, %v952
        %v991 = vmul.f32 %v895, %v956
        %v992 = vmul.f32 %v896, %v960
        %v993 = vmul.f32 %v897, %v948
        %v994 = vmul.f32 %v898, %v952
        %v995 = vmul.f32 %v899, %v956
        %v996 = vmul.f32 %v900, %v960
        %v997 = vmul.f32 %v901, %v948
        %v998 = vmul.f32 %v902, %v952
        %v999 = vmul.f32 %v903, %v956
        %v1000 = vmul.f32 %v904, %v960
        %v1001 = vmul.f32 %v905, %v948
        %v1002 = vmul.f32 %v906, %v952
        %v1003 = vmul.f32 %v907, %v956
        %v1004 = vmul.f32 %v908, %v960
        %v1005 = vmul.f32 %v909, %v948
        %v1006 = vmul.f32 %v910, %v952
        %v1007 = vmul.f32 %v911, %v956
        %v1008 = vmul.f32 %v912, %v960
        %v1009 = vmul.f32 %v913, %v948
        %v1010 = vmul.f32 %v914, %v952
        %v1011 = vmul.f32 %v915, %v956
        %v1012 = vmul.f32 %v916, %v960
        %v1013 = vmul.f32 %v917, %v948
        %v1014 = vmul.f32 %v918, %v952
        %v1015 = vmul.f32 %v919, %v956
        %v1016 = vmul.f32 %v920, %v960
        %v1017 = vmul.f32 %v921, %v948
        %v1018 = vmul.f32 %v922, %v952
        %v1019 = vmul.f32 %v923, %v956
        %v1020 = vmul.f32 %v924, %v960
        %v1021 = vmul.f32 %v925, %v948
        %v1022 = vmul.f32 %v926, %v952
        %v1023 = vmul.f32 %v927, %v956
        %v1024 = vmul.f32 %v928, %v960
        %vm1089 = vcmask 1046528
        %v1090 = vrot.slane %v961, 1
        %v1091 = vrot.slane %v965, 1
        %v1092 = vsel %vm1089, %v1090, %v1091
        %v1093 = vrot.slane %v962, 1
        %v1094 = vrot.slane %v966, 1
        %v1095 = vsel %vm1089, %v1093, %v1094
        %v1096 = vrot.slane %v963, 1
        %v1097 = vrot.slane %v967, 1
        %v1098 = vsel %vm1089, %v1096, %v1097
        %v1099 = vrot.slane %v964, 1
        %v1100 = vrot.slane %v968, 1
        %v1101 = vsel %vm1089, %v1099, %v1100
        %v1102 = vrot.slane %v969, 1
        %v1103 = vrot.slane %v973, 1
        %v1104 = vsel %vm1089, %v1102, %v1103
        %v1105 = vrot.slane %v970, 1
        %v1106 = vrot.slane %v974, 1
        %v1107 = vsel %vm1089, %v1105, %v1106
        %v1108 = vrot.slane %v971, 1
        %v1109 = vrot.slane %v975, 1
        %v1110 = vsel %vm1089, %v1108, %v1109
        %v1111 = vrot.slane %v972, 1
        %v1112 = vrot.slane %v976, 1
        %v1113 = vsel %vm1089, %v1111, %v1112
        %v1114 = vrot.slane %v977, 1
        %v1115 = vrot.slane %v981, 1
        %v1116 = vsel %vm1089, %v1114, %v1115
        %v1117 = vrot.slane %v978, 1
        %v1118 = vrot.slane %v982, 1
        %v1119 = vsel %vm1089, %v1117, %v1118
        %v1120 = vrot.slane %v979, 1
        %v1121 = vrot.slane %v983, 1
        %v1122 = vsel %vm1089, %v1120, %v1121
        %v1123 = vrot.slane %v980, 1
        %v1124 = vrot.slane %v984, 1
        %v1125 = vsel %vm1089, %v1123, %v1124
        %v1126 = vrot.slane %v985, 1
        %v1127 = vrot.slane %v989, 1
        %v1128 = vsel %vm1089, %v1126, %v1127
        %v1129 = vrot.slane %v986, 1
        %v1130 = vrot.slane %v990, 1
        %v1131 = vsel %vm1089, %v1129, %v1130
        %v1132 = vrot.slane %v987, 1
        %v1133 = vrot.slane %v991, 1
        %v1134 = vsel %vm1089, %v1132, %v1133
        %v1135 = vrot.slane %v988, 1
        %v1136 = vrot.slane %v992, 1
        %v1137 = vsel %vm1089, %v1135, %v1136
        %v1138 = vrot.slane %v993, 1
        %v1139 = vrot.slane %v997, 1
        %v1140 = vsel %vm1089, %v1138, %v1139
        %v1141 = vrot.slane %v994, 1
        %v1142 = vrot.slane %v998, 1
        %v1143 = vsel %vm1089, %v1141, %v1142
        %v1144 = vrot.slane %v995, 1
        %v1145 = vrot.slane %v999, 1
        %v1146 = vsel %vm1089, %v1144, %v1145
        %v1147 = vrot.slane %v996, 1
        %v1148 = vrot.slane %v1000, 1
        %v1149 = vsel %vm1089, %v1147, %v1148
        %v1150 = vrot.slane %v1001, 1
        %v1151 = vrot.slane %v1005, 1
        %v1152 = vsel %vm1089, %v1150, %v1151
        %v1153 = vrot.slane %v1002, 1
        %v1154 = vrot.slane %v1006, 1
        %v1155 = vsel %vm1089, %v1153, %v1154
        %v1156 = vrot.slane %v1003, 1
        %v1157 = vrot.slane %v1007, 1
        %v1158 = vsel %vm1089, %v1156, %v1157
        %v1159 = vrot.slane %v1004, 1
        %v1160 = vrot.slane %v1008, 1
        %v1161 = vsel %vm1089, %v1159, %v1160
        %v1162 = vrot.slane %v1009, 1
        %v1163 = vrot.slane %v1013, 1
        %v1164 = vsel %vm1089, %v1162, %v1163
        %v1165 = vrot.slane %v1010, 1
        %v1166 = vrot.slane %v1014, 1
        %v1167 = vsel %vm1089, %v1165, %v1166
        %v1168 = vrot.slane %v1011, 1
        %v1169 = vrot.slane %v1015, 1
        %v1170 = vsel %vm1089, %v1168, %v1169
        %v1171 = vrot.slane %v1012, 1
        %v1172 = vrot.slane %v1016, 1
        %v1173 = vsel %vm1089, %v1171, %v1172
        %v1174 = vrot.slane %v1017, 1
        %v1175 = vrot.slane %v1021, 1
        %v1176 = vsel %vm1089, %v1174, %v1175
        %v1177 = vrot.slane %v1018, 1
        %v1178 = vrot.slane %v1022, 1
        %v1179 = vsel %vm1089, %v1177, %v1178
        %v1180 = vrot.slane %v1019, 1
        %v1181 = vrot.slane %v1023, 1
        %v1182 = vsel %vm1089, %v1180, %v1181
        %v1183 = vrot.slane %v1020, 1
        %v1184 = vrot.slane %v1024, 1
        %v1185 = vsel %vm1089, %v1183, %v1184
        %v1218 = vadd.f32 %v833, %v1092
        %v1219 = vadd.f32 %v834, %v1095
        %v1220 = vadd.f32 %v835, %v1098
        %v1221 = vadd.f32 %v836, %v1101
        %v1222 = vadd.f32 %v837, %v1104
        %v1223 = vadd.f32 %v838, %v1107
        %v1224 = vadd.f32 %v839, %v1110
        %v1225 = vadd.f32 %v840, %v1113
        %v1226 = vadd.f32 %v841, %v1116
        %v1227 = vadd.f32 %v842, %v1119
        %v1228 = vadd.f32 %v843, %v1122
        %v1229 = vadd.f32 %v844, %v1125
        %v1230 = vadd.f32 %v845, %v1128
        %v1231 = vadd.f32 %v846, %v1131
        %v1232 = vadd.f32 %v847, %v1134
        %v1233 = vadd.f32 %v848, %v1137
        %v1234 = vadd.f32 %v849, %v1140
        %v1235 = vadd.f32 %v850, %v1143
        %v1236 = vadd.f32 %v851, %v1146
        %v1237 = vadd.f32 %v852, %v1149
        %v1238 = vadd.f32 %v853, %v1152
        %v1239 = vadd.f32 %v854, %v1155
        %v1240 = vadd.f32 %v855, %v1158
        %v1241 = vadd.f32 %v856, %v1161
        %v1242 = vadd.f32 %v857, %v1164
        %v1243 = vadd.f32 %v858, %v1167
        %v1244 = vadd.f32 %v859, %v1170
        %v1245 = vadd.f32 %v860, %v1173
        %v1246 = vadd.f32 %v861, %v1176
        %v1247 = vadd.f32 %v862, %v1179
        %v1248 = vadd.f32 %v863, %v1182
        %v1249 = vadd.f32 %v864, %v1185
        %v1250 = vlaneseq
        %v1251 = vshrl.u32 %v1250, 7
        %v1252 = vsub.s32 4, %v1251
        %v1253 = vrot.slane %v523, %v1252
        %v1254 = vlaneseq
        %v1255 = vshrl.u32 %v1254, 7
        %v1256 = vsub.s32 4, %v1255
        %v1257 = vrot.slane %v524, %v1256
        %v1258 = vlaneseq
        %v1259 = vshrl.u32 %v1258, 7
        %v1260 = vsub.s32 4, %v1259
        %v1261 = vrot.slane %v525, %v1260
        %v1262 = vlaneseq
        %v1263 = vshrl.u32 %v1262, 7
        %v1264 = vsub.s32 4, %v1263
        %v1265 = vrot.slane %v526, %v1264
        %v1266 = vmul.f32 %v873, %v1253
        %v1267 = vmul.f32 %v874, %v1257
        %v1268 = vmul.f32 %v875, %v1261
        %v1269 = vmul.f32 %v876, %v1265
        %v1270 = vmul.f32 %v877, %v1253
        %v1271 = vmul.f32 %v878, %v1257
        %v1272 = vmul.f32 %v879, %v1261
        %v1273 = vmul.f32 %v880, %v1265
        %v1274 = vmul.f32 %v881, %v1253
        %v1275 = vmul.f32 %v882, %v1257
        %v1276 = vmul.f32 %v883, %v1261
        %v1277 = vmul.f32 %v884, %v1265
        %v1278 = vmul.f32 %v885, %v1253
        %v1279 = vmul.f32 %v886, %v1257
        %v1280 = vmul.f32 %v887, %v1261
        %v1281 = vmul.f32 %v888, %v1265
        %v1282 = vmul.f32 %v889, %v1253
        %v1283 = vmul.f32 %v890, %v1257
        %v1284 = vmul.f32 %v891, %v1261
        %v1285 = vmul.f32 %v892, %v1265
        %v1286 = vmul.f32 %v893, %v1253
        %v1287 = vmul.f32 %v894, %v1257
        %v1288 = vmul.f32 %v895, %v1261
        %v1289 = vmul.f32 %v896, %v1265
        %v1290 = vmul.f32 %v897, %v1253
        %v1291 = vmul.f32 %v898, %v1257
        %v1292 = vmul.f32 %v899, %v1261
        %v1293 = vmul.f32 %v900, %v1265
        %v1294 = vmul.f32 %v901, %v1253
        %v1295 = vmul.f32 %v902, %v1257
        %v1296 = vmul.f32 %v903, %v1261
        %v1297 = vmul.f32 %v904, %v1265
        %v1298 = vmul.f32 %v905, %v1253
        %v1299 = vmul.f32 %v906, %v1257
        %v1300 = vmul.f32 %v907, %v1261
        %v1301 = vmul.f32 %v908, %v1265
        %v1302 = vmul.f32 %v909, %v1253
        %v1303 = vmul.f32 %v910, %v1257
        %v1304 = vmul.f32 %v911, %v1261
        %v1305 = vmul.f32 %v912, %v1265
        %v1306 = vmul.f32 %v913, %v1253
        %v1307 = vmul.f32 %v914, %v1257
        %v1308 = vmul.f32 %v915, %v1261
        %v1309 = vmul.f32 %v916, %v1265
        %v1310 = vmul.f32 %v917, %v1253
        %v1311 = vmul.f32 %v918, %v1257
        %v1312 = vmul.f32 %v919, %v1261
        %v1313 = vmul.f32 %v920, %v1265
        %v1314 = vmul.f32 %v921, %v1253
        %v1315 = vmul.f32 %v922, %v1257
        %v1316 = vmul.f32 %v923, %v1261
        %v1317 = vmul.f32 %v924, %v1265
        %v1318 = vmul.f32 %v925, %v1253
        %v1319 = vmul.f32 %v926, %v1257
        %v1320 = vmul.f32 %v927, %v1261
        %v1321 = vmul.f32 %v928, %v1265
        %v1322 = vmul.f32 %v929, %v1253
        %v1323 = vmul.f32 %v930, %v1257
        %v1324 = vmul.f32 %v931, %v1261
        %v1325 = vmul.f32 %v932, %v1265
        %v1326 = vmul.f32 %v933, %v1253
        %v1327 = vmul.f32 %v934, %v1257
        %v1328 = vmul.f32 %v935, %v1261
        %v1329 = vmul.f32 %v936, %v1265
        %v1394 = vrot.slane %v1266, 1
        %v1395 = vrot.slane %v1270, 1
        %v1396 = vsel %vm1089, %v1394, %v1395
        %v1397 = vrot.slane %v1267, 1
        %v1398 = vrot.slane %v1271, 1
        %v1399 = vsel %vm1089, %v1397, %v1398
        %v1400 = vrot.slane %v1268, 1
        %v1401 = vrot.slane %v1272, 1
        %v1402 = vsel %vm1089, %v1400, %v1401
        %v1403 = vrot.slane %v1269, 1
        %v1404 = vrot.slane %v1273, 1
        %v1405 = vsel %vm1089, %v1403, %v1404
        %v1406 = vrot.slane %v1274, 1
        %v1407 = vrot.slane %v1278, 1
        %v1408 = vsel %vm1089, %v1406, %v1407
        %v1409 = vrot.slane %v1275, 1
        %v1410 = vrot.slane %v1279, 1
        %v1411 = vsel %vm1089, %v1409, %v1410
        %v1412 = vrot.slane %v1276, 1
        %v1413 = vrot.slane %v1280, 1
        %v1414 = vsel %vm1089, %v1412, %v1413
        %v1415 = vrot.slane %v1277, 1
        %v1416 = vrot.slane %v1281, 1
        %v1417 = vsel %vm1089, %v1415, %v1416
        %v1418 = vrot.slane %v1282, 1
        %v1419 = vrot.slane %v1286, 1
        %v1420 = vsel %vm1089, %v1418, %v1419
        %v1421 = vrot.slane %v1283, 1
        %v1422 = vrot.slane %v1287, 1
        %v1423 = vsel %vm1089, %v1421, %v1422
        %v1424 = vrot.slane %v1284, 1
        %v1425 = vrot.slane %v1288, 1
        %v1426 = vsel %vm1089, %v1424, %v1425
        %v1427 = vrot.slane %v1285, 1
        %v1428 = vrot.slane %v1289, 1
        %v1429 = vsel %vm1089, %v1427, %v1428
        %v1430 = vrot.slane %v1290, 1
        %v1431 = vrot.slane %v1294, 1
        %v1432 = vsel %vm1089, %v1430, %v1431
        %v1433 = vrot.slane %v1291, 1
        %v1434 = vrot.slane %v1295, 1
        %v1435 = vsel %vm1089, %v1433, %v1434
        %v1436 = vrot.slane %v1292, 1
        %v1437 = vrot.slane %v1296, 1
        %v1438 = vsel %vm1089, %v1436, %v1437
        %v1439 = vrot.slane %v1293, 1
        %v1440 = vrot.slane %v1297, 1
        %v1441 = vsel %vm1089, %v1439, %v1440
        %v1442 = vrot.slane %v1298, 1
        %v1443 = vrot.slane %v1302, 1
        %v1444 = vsel %vm1089, %v1442, %v1443
        %v1445 = vrot.slane %v1299, 1
        %v1446 = vrot.slane %v1303, 1
        %v1447 = vsel %vm1089, %v1445, %v1446
        %v1448 = vrot.slane %v1300, 1
        %v1449 = vrot.slane %v1304, 1
        %v1450 = vsel %vm1089, %v1448, %v1449
        %v1451 = vrot.slane %v1301, 1
        %v1452 = vrot.slane %v1305, 1
        %v1453 = vsel %vm1089, %v1451, %v1452
        %v1454 = vrot.slane %v1306, 1
        %v1455 = vrot.slane %v1310, 1
        %v1456 = vsel %vm1089, %v1454, %v1455
        %v1457 = vrot.slane %v1307, 1
        %v1458 = vrot.slane %v1311, 1
        %v1459 = vsel %vm1089, %v1457, %v1458
        %v1460 = vrot.slane %v1308, 1
        %v1461 = vrot.slane %v1312, 1
        %v1462 = vsel %vm1089, %v1460, %v1461
        %v1463 = vrot.slane %v1309, 1
        %v1464 = vrot.slane %v1313, 1
        %v1465 = vsel %vm1089, %v1463, %v1464
        %v1466 = vrot.slane %v1314, 1
        %v1467 = vrot.slane %v1318, 1
        %v1468 = vsel %vm1089, %v1466, %v1467
        %v1469 = vrot.slane %v1315, 1
        %v1470 = vrot.slane %v1319, 1
        %v1471 = vsel %vm1089, %v1469, %v1470
        %v1472 = vrot.slane %v1316, 1
        %v1473 = vrot.slane %v1320, 1
        %v1474 = vsel %vm1089, %v1472, %v1473
        %v1475 = vrot.slane %v1317, 1
        %v1476 = vrot.slane %v1321, 1
        %v1477 = vsel %vm1089, %v1475, %v1476
        %v1478 = vrot.slane %v1322, 1
        %v1479 = vrot.slane %v1326, 1
        %v1480 = vsel %vm1089, %v1478, %v1479
        %v1481 = vrot.slane %v1323, 1
        %v1482 = vrot.slane %v1327, 1
        %v1483 = vsel %vm1089, %v1481, %v1482
        %v1484 = vrot.slane %v1324, 1
        %v1485 = vrot.slane %v1328, 1
        %v1486 = vsel %vm1089, %v1484, %v1485
        %v1487 = vrot.slane %v1325, 1
        %v1488 = vrot.slane %v1329, 1
        %v1489 = vsel %vm1089, %v1487, %v1488
        %v1522 = vadd.f32 %v1218, %v1396
        %v1523 = vadd.f32 %v1219, %v1399
        %v1524 = vadd.f32 %v1220, %v1402
        %v1525 = vadd.f32 %v1221, %v1405
        %v1526 = vadd.f32 %v1222, %v1408
        %v1527 = vadd.f32 %v1223, %v1411
        %v1528 = vadd.f32 %v1224, %v1414
        %v1529 = vadd.f32 %v1225, %v1417
        %v1530 = vadd.f32 %v1226, %v1420
        %v1531 = vadd.f32 %v1227, %v1423
        %v1532 = vadd.f32 %v1228, %v1426
        %v1533 = vadd.f32 %v1229, %v1429
        %v1534 = vadd.f32 %v1230, %v1432
        %v1535 = vadd.f32 %v1231, %v1435
        %v1536 = vadd.f32 %v1232, %v1438
        %v1537 = vadd.f32 %v1233, %v1441
        %v1538 = vadd.f32 %v1234, %v1444
        %v1539 = vadd.f32 %v1235, %v1447
        %v1540 = vadd.f32 %v1236, %v1450
        %v1541 = vadd.f32 %v1237, %v1453
        %v1542 = vadd.f32 %v1238, %v1456
        %v1543 = vadd.f32 %v1239, %v1459
        %v1544 = vadd.f32 %v1240, %v1462
        %v1545 = vadd.f32 %v1241, %v1465
        %v1546 = vadd.f32 %v1242, %v1468
        %v1547 = vadd.f32 %v1243, %v1471
        %v1548 = vadd.f32 %v1244, %v1474
        %v1549 = vadd.f32 %v1245, %v1477
        %v1550 = vadd.f32 %v1246, %v1480
        %v1551 = vadd.f32 %v1247, %v1483
        %v1552 = vadd.f32 %v1248, %v1486
        %v1553 = vadd.f32 %v1249, %v1489
        %v1554 = vlaneseq
        %v1555 = vshrl.u32 %v1554, 7
        %v1556 = vsub.s32 7, %v1555
        %v1557 = vrot.slane %v523, %v1556
        %v1558 = vlaneseq
        %v1559 = vshrl.u32 %v1558, 7
        %v1560 = vsub.s32 7, %v1559
        %v1561 = vrot.slane %v524, %v1560
        %v1562 = vlaneseq
        %v1563 = vshrl.u32 %v1562, 7
        %v1564 = vsub.s32 7, %v1563
        %v1565 = vrot.slane %v525, %v1564
        %v1566 = vlaneseq
        %v1567 = vshrl.u32 %v1566, 7
        %v1568 = vsub.s32 7, %v1567
        %v1569 = vrot.slane %v526, %v1568
        %v1570 = vmul.f32 %v881, %v1557
        %v1571 = vmul.f32 %v882, %v1561
        %v1572 = vmul.f32 %v883, %v1565
        %v1573 = vmul.f32 %v884, %v1569
        %v1574 = vmul.f32 %v885, %v1557
        %v1575 = vmul.f32 %v886, %v1561
        %v1576 = vmul.f32 %v887, %v1565
        %v1577 = vmul.f32 %v888, %v1569
        %v1578 = vmul.f32 %v889, %v1557
        %v1579 = vmul.f32 %v890, %v1561
        %v1580 = vmul.f32 %v891, %v1565
        %v1581 = vmul.f32 %v892, %v1569
        %v1582 = vmul.f32 %v893, %v1557
        %v1583 = vmul.f32 %v894, %v1561
        %v1584 = vmul.f32 %v895, %v1565
        %v1585 = vmul.f32 %v896, %v1569
        %v1586 = vmul.f32 %v897, %v1557
        %v1587 = vmul.f32 %v898, %v1561
        %v1588 = vmul.f32 %v899, %v1565
        %v1589 = vmul.f32 %v900, %v1569
        %v1590 = vmul.f32 %v901, %v1557
        %v1591 = vmul.f32 %v902, %v1561
        %v1592 = vmul.f32 %v903, %v1565
        %v1593 = vmul.f32 %v904, %v1569
        %v1594 = vmul.f32 %v905, %v1557
        %v1595 = vmul.f32 %v906, %v1561
        %v1596 = vmul.f32 %v907, %v1565
        %v1597 = vmul.f32 %v908, %v1569
        %v1598 = vmul.f32 %v909, %v1557
        %v1599 = vmul.f32 %v910, %v1561
        %v1600 = vmul.f32 %v911, %v1565
        %v1601 = vmul.f32 %v912, %v1569
        %v1602 = vmul.f32 %v913, %v1557
        %v1603 = vmul.f32 %v914, %v1561
        %v1604 = vmul.f32 %v915, %v1565
        %v1605 = vmul.f32 %v916, %v1569
        %v1606 = vmul.f32 %v917, %v1557
        %v1607 = vmul.f32 %v918, %v1561
        %v1608 = vmul.f32 %v919, %v1565
        %v1609 = vmul.f32 %v920, %v1569
        %v1610 = vmul.f32 %v921, %v1557
        %v1611 = vmul.f32 %v922, %v1561
        %v1612 = vmul.f32 %v923, %v1565
        %v1613 = vmul.f32 %v924, %v1569
        %v1614 = vmul.f32 %v925, %v1557
        %v1615 = vmul.f32 %v926, %v1561
        %v1616 = vmul.f32 %v927, %v1565
        %v1617 = vmul.f32 %v928, %v1569
        %v1618 = vmul.f32 %v929, %v1557
        %v1619 = vmul.f32 %v930, %v1561
        %v1620 = vmul.f32 %v931, %v1565
        %v1621 = vmul.f32 %v932, %v1569
        %v1622 = vmul.f32 %v933, %v1557
        %v1623 = vmul.f32 %v934, %v1561
        %v1624 = vmul.f32 %v935, %v1565
        %v1625 = vmul.f32 %v936, %v1569
        %v1626 = vmul.f32 %v937, %v1557
        %v1627 = vmul.f32 %v938, %v1561
        %v1628 = vmul.f32 %v939, %v1565
        %v1629 = vmul.f32 %v940, %v1569
        %v1630 = vmul.f32 %v941, %v1557
        %v1631 = vmul.f32 %v942, %v1561
        %v1632 = vmul.f32 %v943, %v1565
        %v1633 = vmul.f32 %v944, %v1569
        %v1698 = vrot.slane %v1570, 1
        %v1699 = vrot.slane %v1574, 1
        %v1700 = vsel %vm1089, %v1698, %v1699
        %v1701 = vrot.slane %v1571, 1
        %v1702 = vrot.slane %v1575, 1
        %v1703 = vsel %vm1089, %v1701, %v1702
        %v1704 = vrot.slane %v1572, 1
        %v1705 = vrot.slane %v1576, 1
        %v1706 = vsel %vm1089, %v1704, %v1705
        %v1707 = vrot.slane %v1573, 1
        %v1708 = vrot.slane %v1577, 1
        %v1709 = vsel %vm1089, %v1707, %v1708
        %v1710 = vrot.slane %v1578, 1
        %v1711 = vrot.slane %v1582, 1
        %v1712 = vsel %vm1089, %v1710, %v1711
        %v1713 = vrot.slane %v1579, 1
        %v1714 = vrot.slane %v1583, 1
        %v1715 = vsel %vm1089, %v1713, %v1714
        %v1716 = vrot.slane %v1580, 1
        %v1717 = vrot.slane %v1584, 1
        %v1718 = vsel %vm1089, %v1716, %v1717
        %v1719 = vrot.slane %v1581, 1
        %v1720 = vrot.slane %v1585, 1
        %v1721 = vsel %vm1089, %v1719, %v1720
        %v1722 = vrot.slane %v1586, 1
        %v1723 = vrot.slane %v1590, 1
        %v1724 = vsel %vm1089, %v1722, %v1723
        %v1725 = vrot.slane %v1587, 1
        %v1726 = vrot.slane %v1591, 1
        %v1727 = vsel %vm1089, %v1725, %v1726
        %v1728 = vrot.slane %v1588, 1
        %v1729 = vrot.slane %v1592, 1
        %v1730 = vsel %vm1089, %v1728, %v1729
        %v1731 = vrot.slane %v1589, 1
        %v1732 = vrot.slane %v1593, 1
        %v1733 = vsel %vm1089, %v1731, %v1732
        %v1734 = vrot.slane %v1594, 1
        %v1735 = vrot.slane %v1598, 1
        %v1736 = vsel %vm1089, %v1734, %v1735
        %v1737 = vrot.slane %v1595, 1
        %v1738 = vrot.slane %v1599, 1
        %v1739 = vsel %vm1089, %v1737, %v1738
        %v1740 = vrot.slane %v1596, 1
        %v1741 = vrot.slane %v1600, 1
        %v1742 = vsel %vm1089, %v1740, %v1741
        %v1743 = vrot.slane %v1597, 1
        %v1744 = vrot.slane %v1601, 1
        %v1745 = vsel %vm1089, %v1743, %v1744
        %v1746 = vrot.slane %v1602, 1
        %v1747 = vrot.slane %v1606, 1
        %v1748 = vsel %vm1089, %v1746, %v1747
        %v1749 = vrot.slane %v1603, 1
        %v1750 = vrot.slane %v1607, 1
        %v1751 = vsel %vm1089, %v1749, %v1750
        %v1752 = vrot.slane %v1604, 1
        %v1753 = vrot.slane %v1608, 1
        %v1754 = vsel %vm1089, %v1752, %v1753
        %v1755 = vrot.slane %v1605, 1
        %v1756 = vrot.slane %v1609, 1
        %v1757 = vsel %vm1089, %v1755, %v1756
        %v1758 = vrot.slane %v1610, 1
        %v1759 = vrot.slane %v1614, 1
        %v1760 = vsel %vm1089, %v1758, %v1759
        %v1761 = vrot.slane %v1611, 1
        %v1762 = vrot.slane %v1615, 1
        %v1763 = vsel %vm1089, %v1761, %v1762
        %v1764 = vrot.slane %v1612, 1
        %v1765 = vrot.slane %v1616, 1
        %v1766 = vsel %vm1089, %v1764, %v1765
        %v1767 = vrot.slane %v1613, 1
        %v1768 = vrot.slane %v1617, 1
        %v1769 = vsel %vm1089, %v1767, %v1768
        %v1770 = vrot.slane %v1618, 1
        %v1771 = vrot.slane %v1622, 1
        %v1772 = vsel %vm1089, %v1770, %v1771
        %v1773 = vrot.slane %v1619, 1
        %v1774 = vrot.slane %v1623, 1
        %v1775 = vsel %vm1089, %v1773, %v1774
        %v1776 = vrot.slane %v1620, 1
        %v1777 = vrot.slane %v1624, 1
        %v1778 = vsel %vm1089, %v1776, %v1777
        %v1779 = vrot.slane %v1621, 1
        %v1780 = vrot.slane %v1625, 1
        %v1781 = vsel %vm1089, %v1779, %v1780
        %v1782 = vrot.slane %v1626, 1
        %v1783 = vrot.slane %v1630, 1
        %v1784 = vsel %vm1089, %v1782, %v1783
        %v1785 = vrot.slane %v1627, 1
        %v1786 = vrot.slane %v1631, 1
        %v1787 = vsel %vm1089, %v1785, %v1786
        %v1788 = vrot.slane %v1628, 1
        %v1789 = vrot.slane %v1632, 1
        %v1790 = vsel %vm1089, %v1788, %v1789
        %v1791 = vrot.slane %v1629, 1
        %v1792 = vrot.slane %v1633, 1
        %v1793 = vsel %vm1089, %v1791, %v1792
        %v1826 = vadd.f32 %v1522, %v1700
        %v1827 = vadd.f32 %v1523, %v1703
        %v1828 = vadd.f32 %v1524, %v1706
        %v1829 = vadd.f32 %v1525, %v1709
        %v1830 = vadd.f32 %v1526, %v1712
        %v1831 = vadd.f32 %v1527, %v1715
        %v1832 = vadd.f32 %v1528, %v1718
        %v1833 = vadd.f32 %v1529, %v1721
        %v1834 = vadd.f32 %v1530, %v1724
        %v1835 = vadd.f32 %v1531, %v1727
        %v1836 = vadd.f32 %v1532, %v1730
        %v1837 = vadd.f32 %v1533, %v1733
        %v1838 = vadd.f32 %v1534, %v1736
        %v1839 = vadd.f32 %v1535, %v1739
        %v1840 = vadd.f32 %v1536, %v1742
        %v1841 = vadd.f32 %v1537, %v1745
        %v1842 = vadd.f32 %v1538, %v1748
        %v1843 = vadd.f32 %v1539, %v1751
        %v1844 = vadd.f32 %v1540, %v1754
        %v1845 = vadd.f32 %v1541, %v1757
        %v1846 = vadd.f32 %v1542, %v1760
        %v1847 = vadd.f32 %v1543, %v1763
        %v1848 = vadd.f32 %v1544, %v1766
        %v1849 = vadd.f32 %v1545, %v1769
        %v1850 = vadd.f32 %v1546, %v1772
        %v1851 = vadd.f32 %v1547, %v1775
        %v1852 = vadd.f32 %v1548, %v1778
        %v1853 = vadd.f32 %v1549, %v1781
        %v1854 = vadd.f32 %v1550, %v1784
        %v1855 = vadd.f32 %v1551, %v1787
        %v1856 = vadd.f32 %v1552, %v1790
        %v1857 = vadd.f32 %v1553, %v1793
        %v1858 = vld [vmem:[#allocation2] sm:$0xfc]
        %v1859 = vld [vmem:[#allocation2 + $0x8] sm:$0xfc]
        %v1860 = vld [vmem:[#allocation2 + $0x10] sm:$0xfc]
        %v1861 = vld [vmem:[#allocation2 + $0x18] sm:$0xfc]
        %v1862 = vld [vmem:[#allocation2 + $0x20] sm:$0x3]
        %v1863 = vld [vmem:[#allocation2 + $0x28] sm:$0x3]
        %v1864 = vld [vmem:[#allocation2 + $0x30] sm:$0x3]
        %v1865 = vld [vmem:[#allocation2 + $0x38] sm:$0x3]
        %v1866 = vld [vmem:[#allocation2 + $0x40] sm:$0xfc]
        %v1867 = vld [vmem:[#allocation2 + $0x48] sm:$0xfc]
        %v1868 = vld [vmem:[#allocation2 + $0x50] sm:$0xfc]
        %v1869 = vld [vmem:[#allocation2 + $0x58] sm:$0xfc]
        %v1870 = vld [vmem:[#allocation2 + $0x60] sm:$0x3]
        %v1871 = vld [vmem:[#allocation2 + $0x68] sm:$0x3]
        %v1872 = vld [vmem:[#allocation2 + $0x70] sm:$0x3]
        %v1873 = vld [vmem:[#allocation2 + $0x78] sm:$0x3]
        %v1874 = vld [vmem:[#allocation2 + $0x80] sm:$0xfc]
        %v1875 = vld [vmem:[#allocation2 + $0x88] sm:$0xfc]
        %v1876 = vld [vmem:[#allocation2 + $0x90] sm:$0xfc]
        %v1877 = vld [vmem:[#allocation2 + $0x98] sm:$0xfc]
        %v1878 = vld [vmem:[#allocation2 + $0xa0] sm:$0x3]
        %v1879 = vld [vmem:[#allocation2 + $0xa8] sm:$0x3]
        %v1880 = vld [vmem:[#allocation2 + $0xb0] sm:$0x3]
        %v1881 = vld [vmem:[#allocation2 + $0xb8] sm:$0x3]
        %v1882 = vld [vmem:[#allocation2 + $0xc0] sm:$0xfc]
        %v1883 = vld [vmem:[#allocation2 + $0xc8] sm:$0xfc]
        %v1884 = vld [vmem:[#allocation2 + $0xd0] sm:$0xfc]
        %v1885 = vld [vmem:[#allocation2 + $0xd8] sm:$0xfc]
        %v1886 = vld [vmem:[#allocation2 + $0xe0] sm:$0x3]
        %v1887 = vld [vmem:[#allocation2 + $0xe8] sm:$0x3]
        %v1888 = vld [vmem:[#allocation2 + $0xf0] sm:$0x3]
        %v1889 = vld [vmem:[#allocation2 + $0xf8] sm:$0x3]
        %v1890 = vld [vmem:[#allocation2 + $0x100] sm:$0xfc]
        %v1891 = vld [vmem:[#allocation2 + $0x108] sm:$0xfc]
        %v1892 = vld [vmem:[#allocation2 + $0x110] sm:$0xfc]
        %v1893 = vld [vmem:[#allocation2 + $0x118] sm:$0xfc]
        %v1894 = vld [vmem:[#allocation2 + $0x120] sm:$0x3]
        %v1895 = vld [vmem:[#allocation2 + $0x128] sm:$0x3]
        %v1896 = vld [vmem:[#allocation2 + $0x130] sm:$0x3]
        %v1897 = vld [vmem:[#allocation2 + $0x138] sm:$0x3]
        %v1898 = vld [vmem:[#allocation2 + $0x140] sm:$0xfc]
        %v1899 = vld [vmem:[#allocation2 + $0x148] sm:$0xfc]
        %v1900 = vld [vmem:[#allocation2 + $0x150] sm:$0xfc]
        %v1901 = vld [vmem:[#allocation2 + $0x158] sm:$0xfc]
        %v1902 = vld [vmem:[#allocation2 + $0x160] sm:$0x3]
        %v1903 = vld [vmem:[#allocation2 + $0x168] sm:$0x3]
        %v1904 = vld [vmem:[#allocation2 + $0x170] sm:$0x3]
        %v1905 = vld [vmem:[#allocation2 + $0x178] sm:$0x3]
        %v1906 = vld [vmem:[#allocation2 + $0x180] sm:$0xfc]
        %v1907 = vld [vmem:[#allocation2 + $0x188] sm:$0xfc]
        %v1908 = vld [vmem:[#allocation2 + $0x190] sm:$0xfc]
        %v1909 = vld [vmem:[#allocation2 + $0x198] sm:$0xfc]
        %v1910 = vld [vmem:[#allocation2 + $0x1a0] sm:$0x3]
        %v1911 = vld [vmem:[#allocation2 + $0x1a8] sm:$0x3]
        %v1912 = vld [vmem:[#allocation2 + $0x1b0] sm:$0x3]
        %v1913 = vld [vmem:[#allocation2 + $0x1b8] sm:$0x3]
        %v1914 = vld [vmem:[#allocation2 + $0x1c0] sm:$0xfc]
        %v1915 = vld [vmem:[#allocation2 + $0x1c8] sm:$0xfc]
        %v1916 = vld [vmem:[#allocation2 + $0x1d0] sm:$0xfc]
        %v1917 = vld [vmem:[#allocation2 + $0x1d8] sm:$0xfc]
        %v1918 = vld [vmem:[#allocation2 + $0x1e0] sm:$0x3]
        %v1919 = vld [vmem:[#allocation2 + $0x1e8] sm:$0x3]
        %v1920 = vld [vmem:[#allocation2 + $0x1f0] sm:$0x3]
        %v1921 = vld [vmem:[#allocation2 + $0x1f8] sm:$0x3]
        %v1922 = vld [vmem:[#allocation2 + $0x200] sm:$0xfc]
        %v1923 = vld [vmem:[#allocation2 + $0x208] sm:$0xfc]
        %v1924 = vld [vmem:[#allocation2 + $0x210] sm:$0xfc]
        %v1925 = vld [vmem:[#allocation2 + $0x218] sm:$0xfc]
        %v1926 = vld [vmem:[#allocation2 + $0x220] sm:$0x3]
        %v1927 = vld [vmem:[#allocation2 + $0x228] sm:$0x3]
        %v1928 = vld [vmem:[#allocation2 + $0x230] sm:$0x3]
        %v1929 = vld [vmem:[#allocation2 + $0x238] sm:$0x3]
        %v1930 = vld [vmem:[#allocation2 + $0x240] sm:$0xfc]
        %v1931 = vld [vmem:[#allocation2 + $0x248] sm:$0xfc]
        %v1932 = vld [vmem:[#allocation2 + $0x250] sm:$0xfc]
        %v1933 = vld [vmem:[#allocation2 + $0x258] sm:$0xfc]
        %v1934 = vld [vmem:[#allocation2 + $0x260] sm:$0x3]
        %v1935 = vld [vmem:[#allocation2 + $0x268] sm:$0x3]
        %v1936 = vld [vmem:[#allocation2 + $0x270] sm:$0x3]
        %v1937 = vld [vmem:[#allocation2 + $0x278] sm:$0x3]
        %v1938 = vlaneseq
        %v1939 = vshrl.u32 %v1938, 7
        %v1940 = vsub.s32 2, %v1939
        %v1941 = vrot.slane %v523, %v1940
        %v1942 = vlaneseq
        %v1943 = vshrl.u32 %v1942, 7
        %v1944 = vsub.s32 2, %v1943
        %v1945 = vrot.slane %v524, %v1944
        %v1946 = vlaneseq
        %v1947 = vshrl.u32 %v1946, 7
        %v1948 = vsub.s32 2, %v1947
        %v1949 = vrot.slane %v525, %v1948
        %v1950 = vlaneseq
        %v1951 = vshrl.u32 %v1950, 7
        %v1952 = vsub.s32 2, %v1951
        %v1953 = vrot.slane %v526, %v1952
        %v1954 = vmul.f32 %v1858, %v1941
        %v1955 = vmul.f32 %v1859, %v1945
        %v1956 = vmul.f32 %v1860, %v1949
        %v1957 = vmul.f32 %v1861, %v1953
        %v1958 = vmul.f32 %v1862, %v1941
        %v1959 = vmul.f32 %v1863, %v1945
        %v1960 = vmul.f32 %v1864, %v1949
        %v1961 = vmul.f32 %v1865, %v1953
        %v1962 = vmul.f32 %v1866, %v1941
        %v1963 = vmul.f32 %v1867, %v1945
        %v1964 = vmul.f32 %v1868, %v1949
        %v1965 = vmul.f32 %v1869, %v1953
        %v1966 = vmul.f32 %v1870, %v1941
        %v1967 = vmul.f32 %v1871, %v1945
        %v1968 = vmul.f32 %v1872, %v1949
        %v1969 = vmul.f32 %v1873, %v1953
        %v1970 = vmul.f32 %v1874, %v1941
        %v1971 = vmul.f32 %v1875, %v1945
        %v1972 = vmul.f32 %v1876, %v1949
        %v1973 = vmul.f32 %v1877, %v1953
        %v1974 = vmul.f32 %v1878, %v1941
        %v1975 = vmul.f32 %v1879, %v1945
        %v1976 = vmul.f32 %v1880, %v1949
        %v1977 = vmul.f32 %v1881, %v1953
        %v1978 = vmul.f32 %v1882, %v1941
        %v1979 = vmul.f32 %v1883, %v1945
        %v1980 = vmul.f32 %v1884, %v1949
        %v1981 = vmul.f32 %v1885, %v1953
        %v1982 = vmul.f32 %v1886, %v1941
        %v1983 = vmul.f32 %v1887, %v1945
        %v1984 = vmul.f32 %v1888, %v1949
        %v1985 = vmul.f32 %v1889, %v1953
        %v1986 = vmul.f32 %v1890, %v1941
        %v1987 = vmul.f32 %v1891, %v1945
        %v1988 = vmul.f32 %v1892, %v1949
        %v1989 = vmul.f32 %v1893, %v1953
        %v1990 = vmul.f32 %v1894, %v1941
        %v1991 = vmul.f32 %v1895, %v1945
        %v1992 = vmul.f32 %v1896, %v1949
        %v1993 = vmul.f32 %v1897, %v1953
        %v1994 = vmul.f32 %v1898, %v1941
        %v1995 = vmul.f32 %v1899, %v1945
        %v1996 = vmul.f32 %v1900, %v1949
        %v1997 = vmul.f32 %v1901, %v1953
        %v1998 = vmul.f32 %v1902, %v1941
        %v1999 = vmul.f32 %v1903, %v1945
        %v2000 = vmul.f32 %v1904, %v1949
        %v2001 = vmul.f32 %v1905, %v1953
        %v2002 = vmul.f32 %v1906, %v1941
        %v2003 = vmul.f32 %v1907, %v1945
        %v2004 = vmul.f32 %v1908, %v1949
        %v2005 = vmul.f32 %v1909, %v1953
        %v2006 = vmul.f32 %v1910, %v1941
        %v2007 = vmul.f32 %v1911, %v1945
        %v2008 = vmul.f32 %v1912, %v1949
        %v2009 = vmul.f32 %v1913, %v1953
        %v2010 = vmul.f32 %v1914, %v1941
        %v2011 = vmul.f32 %v1915, %v1945
        %v2012 = vmul.f32 %v1916, %v1949
        %v2013 = vmul.f32 %v1917, %v1953
        %v2014 = vmul.f32 %v1918, %v1941
        %v2015 = vmul.f32 %v1919, %v1945
        %v2016 = vmul.f32 %v1920, %v1949
        %v2017 = vmul.f32 %v1921, %v1953
        %vm2082 = vcmask 1045504
        %v2083 = vrot.slane %v1954, 2
        %v2084 = vrot.slane %v1958, 2
        %v2085 = vsel %vm2082, %v2083, %v2084
        %v2086 = vrot.slane %v1955, 2
        %v2087 = vrot.slane %v1959, 2
        %v2088 = vsel %vm2082, %v2086, %v2087
        %v2089 = vrot.slane %v1956, 2
        %v2090 = vrot.slane %v1960, 2
        %v2091 = vsel %vm2082, %v2089, %v2090
        %v2092 = vrot.slane %v1957, 2
        %v2093 = vrot.slane %v1961, 2
        %v2094 = vsel %vm2082, %v2092, %v2093
        %v2095 = vrot.slane %v1962, 2
        %v2096 = vrot.slane %v1966, 2
        %v2097 = vsel %vm2082, %v2095, %v2096
        %v2098 = vrot.slane %v1963, 2
        %v2099 = vrot.slane %v1967, 2
        %v2100 = vsel %vm2082, %v2098, %v2099
        %v2101 = vrot.slane %v1964, 2
        %v2102 = vrot.slane %v1968, 2
        %v2103 = vsel %vm2082, %v2101, %v2102
        %v2104 = vrot.slane %v1965, 2
        %v2105 = vrot.slane %v1969, 2
        %v2106 = vsel %vm2082, %v2104, %v2105
        %v2107 = vrot.slane %v1970, 2
        %v2108 = vrot.slane %v1974, 2
        %v2109 = vsel %vm2082, %v2107, %v2108
        %v2110 = vrot.slane %v1971, 2
        %v2111 = vrot.slane %v1975, 2
        %v2112 = vsel %vm2082, %v2110, %v2111
        %v2113 = vrot.slane %v1972, 2
        %v2114 = vrot.slane %v1976, 2
        %v2115 = vsel %vm2082, %v2113, %v2114
        %v2116 = vrot.slane %v1973, 2
        %v2117 = vrot.slane %v1977, 2
        %v2118 = vsel %vm2082, %v2116, %v2117
        %v2119 = vrot.slane %v1978, 2
        %v2120 = vrot.slane %v1982, 2
        %v2121 = vsel %vm2082, %v2119, %v2120
        %v2122 = vrot.slane %v1979, 2
        %v2123 = vrot.slane %v1983, 2
        %v2124 = vsel %vm2082, %v2122, %v2123
        %v2125 = vrot.slane %v1980, 2
        %v2126 = vrot.slane %v1984, 2
        %v2127 = vsel %vm2082, %v2125, %v2126
        %v2128 = vrot.slane %v1981, 2
        %v2129 = vrot.slane %v1985, 2
        %v2130 = vsel %vm2082, %v2128, %v2129
        %v2131 = vrot.slane %v1986, 2
        %v2132 = vrot.slane %v1990, 2
        %v2133 = vsel %vm2082, %v2131, %v2132
        %v2134 = vrot.slane %v1987, 2
        %v2135 = vrot.slane %v1991, 2
        %v2136 = vsel %vm2082, %v2134, %v2135
        %v2137 = vrot.slane %v1988, 2
        %v2138 = vrot.slane %v1992, 2
        %v2139 = vsel %vm2082, %v2137, %v2138
        %v2140 = vrot.slane %v1989, 2
        %v2141 = vrot.slane %v1993, 2
        %v2142 = vsel %vm2082, %v2140, %v2141
        %v2143 = vrot.slane %v1994, 2
        %v2144 = vrot.slane %v1998, 2
        %v2145 = vsel %vm2082, %v2143, %v2144
        %v2146 = vrot.slane %v1995, 2
        %v2147 = vrot.slane %v1999, 2
        %v2148 = vsel %vm2082, %v2146, %v2147
        %v2149 = vrot.slane %v1996, 2
        %v2150 = vrot.slane %v2000, 2
        %v2151 = vsel %vm2082, %v2149, %v2150
        %v2152 = vrot.slane %v1997, 2
        %v2153 = vrot.slane %v2001, 2
        %v2154 = vsel %vm2082, %v2152, %v2153
        %v2155 = vrot.slane %v2002, 2
        %v2156 = vrot.slane %v2006, 2
        %v2157 = vsel %vm2082, %v2155, %v2156
        %v2158 = vrot.slane %v2003, 2
        %v2159 = vrot.slane %v2007, 2
        %v2160 = vsel %vm2082, %v2158, %v2159
        %v2161 = vrot.slane %v2004, 2
        %v2162 = vrot.slane %v2008, 2
        %v2163 = vsel %vm2082, %v2161, %v2162
        %v2164 = vrot.slane %v2005, 2
        %v2165 = vrot.slane %v2009, 2
        %v2166 = vsel %vm2082, %v2164, %v2165
        %v2167 = vrot.slane %v2010, 2
        %v2168 = vrot.slane %v2014, 2
        %v2169 = vsel %vm2082, %v2167, %v2168
        %v2170 = vrot.slane %v2011, 2
        %v2171 = vrot.slane %v2015, 2
        %v2172 = vsel %vm2082, %v2170, %v2171
        %v2173 = vrot.slane %v2012, 2
        %v2174 = vrot.slane %v2016, 2
        %v2175 = vsel %vm2082, %v2173, %v2174
        %v2176 = vrot.slane %v2013, 2
        %v2177 = vrot.slane %v2017, 2
        %v2178 = vsel %vm2082, %v2176, %v2177
        %v2211 = vadd.f32 %v1826, %v2085
        %v2212 = vadd.f32 %v1827, %v2088
        %v2213 = vadd.f32 %v1828, %v2091
        %v2214 = vadd.f32 %v1829, %v2094
        %v2215 = vadd.f32 %v1830, %v2097
        %v2216 = vadd.f32 %v1831, %v2100
        %v2217 = vadd.f32 %v1832, %v2103
        %v2218 = vadd.f32 %v1833, %v2106
        %v2219 = vadd.f32 %v1834, %v2109
        %v2220 = vadd.f32 %v1835, %v2112
        %v2221 = vadd.f32 %v1836, %v2115
        %v2222 = vadd.f32 %v1837, %v2118
        %v2223 = vadd.f32 %v1838, %v2121
        %v2224 = vadd.f32 %v1839, %v2124
        %v2225 = vadd.f32 %v1840, %v2127
        %v2226 = vadd.f32 %v1841, %v2130
        %v2227 = vadd.f32 %v1842, %v2133
        %v2228 = vadd.f32 %v1843, %v2136
        %v2229 = vadd.f32 %v1844, %v2139
        %v2230 = vadd.f32 %v1845, %v2142
        %v2231 = vadd.f32 %v1846, %v2145
        %v2232 = vadd.f32 %v1847, %v2148
        %v2233 = vadd.f32 %v1848, %v2151
        %v2234 = vadd.f32 %v1849, %v2154
        %v2235 = vadd.f32 %v1850, %v2157
        %v2236 = vadd.f32 %v1851, %v2160
        %v2237 = vadd.f32 %v1852, %v2163
        %v2238 = vadd.f32 %v1853, %v2166
        %v2239 = vadd.f32 %v1854, %v2169
        %v2240 = vadd.f32 %v1855, %v2172
        %v2241 = vadd.f32 %v1856, %v2175
        %v2242 = vadd.f32 %v1857, %v2178
        %v2243 = vlaneseq
        %v2244 = vshrl.u32 %v2243, 7
        %v2245 = vsub.s32 5, %v2244
        %v2246 = vrot.slane %v523, %v2245
        %v2247 = vlaneseq
        %v2248 = vshrl.u32 %v2247, 7
        %v2249 = vsub.s32 5, %v2248
        %v2250 = vrot.slane %v524, %v2249
        %v2251 = vlaneseq
        %v2252 = vshrl.u32 %v2251, 7
        %v2253 = vsub.s32 5, %v2252
        %v2254 = vrot.slane %v525, %v2253
        %v2255 = vlaneseq
        %v2256 = vshrl.u32 %v2255, 7
        %v2257 = vsub.s32 5, %v2256
        %v2258 = vrot.slane %v526, %v2257
        %v2259 = vmul.f32 %v1866, %v2246
        %v2260 = vmul.f32 %v1867, %v2250
        %v2261 = vmul.f32 %v1868, %v2254
        %v2262 = vmul.f32 %v1869, %v2258
        %v2263 = vmul.f32 %v1870, %v2246
        %v2264 = vmul.f32 %v1871, %v2250
        %v2265 = vmul.f32 %v1872, %v2254
        %v2266 = vmul.f32 %v1873, %v2258
        %v2267 = vmul.f32 %v1874, %v2246
        %v2268 = vmul.f32 %v1875, %v2250
        %v2269 = vmul.f32 %v1876, %v2254
        %v2270 = vmul.f32 %v1877, %v2258
        %v2271 = vmul.f32 %v1878, %v2246
        %v2272 = vmul.f32 %v1879, %v2250
        %v2273 = vmul.f32 %v1880, %v2254
        %v2274 = vmul.f32 %v1881, %v2258
        %v2275 = vmul.f32 %v1882, %v2246
        %v2276 = vmul.f32 %v1883, %v2250
        %v2277 = vmul.f32 %v1884, %v2254
        %v2278 = vmul.f32 %v1885, %v2258
        %v2279 = vmul.f32 %v1886, %v2246
        %v2280 = vmul.f32 %v1887, %v2250
        %v2281 = vmul.f32 %v1888, %v2254
        %v2282 = vmul.f32 %v1889, %v2258
        %v2283 = vmul.f32 %v1890, %v2246
        %v2284 = vmul.f32 %v1891, %v2250
        %v2285 = vmul.f32 %v1892, %v2254
        %v2286 = vmul.f32 %v1893, %v2258
        %v2287 = vmul.f32 %v1894, %v2246
        %v2288 = vmul.f32 %v1895, %v2250
        %v2289 = vmul.f32 %v1896, %v2254
        %v2290 = vmul.f32 %v1897, %v2258
        %v2291 = vmul.f32 %v1898, %v2246
        %v2292 = vmul.f32 %v1899, %v2250
        %v2293 = vmul.f32 %v1900, %v2254
        %v2294 = vmul.f32 %v1901, %v2258
        %v2295 = vmul.f32 %v1902, %v2246
        %v2296 = vmul.f32 %v1903, %v2250
        %v2297 = vmul.f32 %v1904, %v2254
        %v2298 = vmul.f32 %v1905, %v2258
        %v2299 = vmul.f32 %v1906, %v2246
        %v2300 = vmul.f32 %v1907, %v2250
        %v2301 = vmul.f32 %v1908, %v2254
        %v2302 = vmul.f32 %v1909, %v2258
        %v2303 = vmul.f32 %v1910, %v2246
        %v2304 = vmul.f32 %v1911, %v2250
        %v2305 = vmul.f32 %v1912, %v2254
        %v2306 = vmul.f32 %v1913, %v2258
        %v2307 = vmul.f32 %v1914, %v2246
        %v2308 = vmul.f32 %v1915, %v2250
        %v2309 = vmul.f32 %v1916, %v2254
        %v2310 = vmul.f32 %v1917, %v2258
        %v2311 = vmul.f32 %v1918, %v2246
        %v2312 = vmul.f32 %v1919, %v2250
        %v2313 = vmul.f32 %v1920, %v2254
        %v2314 = vmul.f32 %v1921, %v2258
        %v2315 = vmul.f32 %v1922, %v2246
        %v2316 = vmul.f32 %v1923, %v2250
        %v2317 = vmul.f32 %v1924, %v2254
        %v2318 = vmul.f32 %v1925, %v2258
        %v2319 = vmul.f32 %v1926, %v2246
        %v2320 = vmul.f32 %v1927, %v2250
        %v2321 = vmul.f32 %v1928, %v2254
        %v2322 = vmul.f32 %v1929, %v2258
        %v2387 = vrot.slane %v2259, 2
        %v2388 = vrot.slane %v2263, 2
        %v2389 = vsel %vm2082, %v2387, %v2388
        %v2390 = vrot.slane %v2260, 2
        %v2391 = vrot.slane %v2264, 2
        %v2392 = vsel %vm2082, %v2390, %v2391
        %v2393 = vrot.slane %v2261, 2
        %v2394 = vrot.slane %v2265, 2
        %v2395 = vsel %vm2082, %v2393, %v2394
        %v2396 = vrot.slane %v2262, 2
        %v2397 = vrot.slane %v2266, 2
        %v2398 = vsel %vm2082, %v2396, %v2397
        %v2399 = vrot.slane %v2267, 2
        %v2400 = vrot.slane %v2271, 2
        %v2401 = vsel %vm2082, %v2399, %v2400
        %v2402 = vrot.slane %v2268, 2
        %v2403 = vrot.slane %v2272, 2
        %v2404 = vsel %vm2082, %v2402, %v2403
        %v2405 = vrot.slane %v2269, 2
        %v2406 = vrot.slane %v2273, 2
        %v2407 = vsel %vm2082, %v2405, %v2406
        %v2408 = vrot.slane %v2270, 2
        %v2409 = vrot.slane %v2274, 2
        %v2410 = vsel %vm2082, %v2408, %v2409
        %v2411 = vrot.slane %v2275, 2
        %v2412 = vrot.slane %v2279, 2
        %v2413 = vsel %vm2082, %v2411, %v2412
        %v2414 = vrot.slane %v2276, 2
        %v2415 = vrot.slane %v2280, 2
        %v2416 = vsel %vm2082, %v2414, %v2415
        %v2417 = vrot.slane %v2277, 2
        %v2418 = vrot.slane %v2281, 2
        %v2419 = vsel %vm2082, %v2417, %v2418
        %v2420 = vrot.slane %v2278, 2
        %v2421 = vrot.slane %v2282, 2
        %v2422 = vsel %vm2082, %v2420, %v2421
        %v2423 = vrot.slane %v2283, 2
        %v2424 = vrot.slane %v2287, 2
        %v2425 = vsel %vm2082, %v2423, %v2424
        %v2426 = vrot.slane %v2284, 2
        %v2427 = vrot.slane %v2288, 2
        %v2428 = vsel %vm2082, %v2426, %v2427
        %v2429 = vrot.slane %v2285, 2
        %v2430 = vrot.slane %v2289, 2
        %v2431 = vsel %vm2082, %v2429, %v2430
        %v2432 = vrot.slane %v2286, 2
        %v2433 = vrot.slane %v2290, 2
        %v2434 = vsel %vm2082, %v2432, %v2433
        %v2435 = vrot.slane %v2291, 2
        %v2436 = vrot.slane %v2295, 2
        %v2437 = vsel %vm2082, %v2435, %v2436
        %v2438 = vrot.slane %v2292, 2
        %v2439 = vrot.slane %v2296, 2
        %v2440 = vsel %vm2082, %v2438, %v2439
        %v2441 = vrot.slane %v2293, 2
        %v2442 = vrot.slane %v2297, 2
        %v2443 = vsel %vm2082, %v2441, %v2442
        %v2444 = vrot.slane %v2294, 2
        %v2445 = vrot.slane %v2298, 2
        %v2446 = vsel %vm2082, %v2444, %v2445
        %v2447 = vrot.slane %v2299, 2
        %v2448 = vrot.slane %v2303, 2
        %v2449 = vsel %vm2082, %v2447, %v2448
        %v2450 = vrot.slane %v2300, 2
        %v2451 = vrot.slane %v2304, 2
        %v2452 = vsel %vm2082, %v2450, %v2451
        %v2453 = vrot.slane %v2301, 2
        %v2454 = vrot.slane %v2305, 2
        %v2455 = vsel %vm2082, %v2453, %v2454
        %v2456 = vrot.slane %v2302, 2
        %v2457 = vrot.slane %v2306, 2
        %v2458 = vsel %vm2082, %v2456, %v2457
        %v2459 = vrot.slane %v2307, 2
        %v2460 = vrot.slane %v2311, 2
        %v2461 = vsel %vm2082, %v2459, %v2460
        %v2462 = vrot.slane %v2308, 2
        %v2463 = vrot.slane %v2312, 2
        %v2464 = vsel %vm2082, %v2462, %v2463
        %v2465 = vrot.slane %v2309, 2
        %v2466 = vrot.slane %v2313, 2
        %v2467 = vsel %vm2082, %v2465, %v2466
        %v2468 = vrot.slane %v2310, 2
        %v2469 = vrot.slane %v2314, 2
        %v2470 = vsel %vm2082, %v2468, %v2469
        %v2471 = vrot.slane %v2315, 2
        %v2472 = vrot.slane %v2319, 2
        %v2473 = vsel %vm2082, %v2471, %v2472
        %v2474 = vrot.slane %v2316, 2
        %v2475 = vrot.slane %v2320, 2
        %v2476 = vsel %vm2082, %v2474, %v2475
        %v2477 = vrot.slane %v2317, 2
        %v2478 = vrot.slane %v2321, 2
        %v2479 = vsel %vm2082, %v2477, %v2478
        %v2480 = vrot.slane %v2318, 2
        %v2481 = vrot.slane %v2322, 2
        %v2482 = vsel %vm2082, %v2480, %v2481
        %v2515 = vadd.f32 %v2211, %v2389
        %v2516 = vadd.f32 %v2212, %v2392
        %v2517 = vadd.f32 %v2213, %v2395
        %v2518 = vadd.f32 %v2214, %v2398
        %v2519 = vadd.f32 %v2215, %v2401
        %v2520 = vadd.f32 %v2216, %v2404
        %v2521 = vadd.f32 %v2217, %v2407
        %v2522 = vadd.f32 %v2218, %v2410
        %v2523 = vadd.f32 %v2219, %v2413
        %v2524 = vadd.f32 %v2220, %v2416
        %v2525 = vadd.f32 %v2221, %v2419
        %v2526 = vadd.f32 %v2222, %v2422
        %v2527 = vadd.f32 %v2223, %v2425
        %v2528 = vadd.f32 %v2224, %v2428
        %v2529 = vadd.f32 %v2225, %v2431
        %v2530 = vadd.f32 %v2226, %v2434
        %v2531 = vadd.f32 %v2227, %v2437
        %v2532 = vadd.f32 %v2228, %v2440
        %v2533 = vadd.f32 %v2229, %v2443
        %v2534 = vadd.f32 %v2230, %v2446
        %v2535 = vadd.f32 %v2231, %v2449
        %v2536 = vadd.f32 %v2232, %v2452
        %v2537 = vadd.f32 %v2233, %v2455
        %v2538 = vadd.f32 %v2234, %v2458
        %v2539 = vadd.f32 %v2235, %v2461
        %v2540 = vadd.f32 %v2236, %v2464
        %v2541 = vadd.f32 %v2237, %v2467
        %v2542 = vadd.f32 %v2238, %v2470
        %v2543 = vadd.f32 %v2239, %v2473
        %v2544 = vadd.f32 %v2240, %v2476
        %v2545 = vadd.f32 %v2241, %v2479
        %v2546 = vadd.f32 %v2242, %v2482
        %v2547 = vlaneseq
        %v2548 = vshrl.u32 %v2547, 7
        %v2549 = vsub.s32 0, %v2548
        %v2550 = vrot.slane %v527, %v2549
        %v2551 = vlaneseq
        %v2552 = vshrl.u32 %v2551, 7
        %v2553 = vsub.s32 0, %v2552
        %v2554 = vrot.slane %v528, %v2553
        %v2555 = vlaneseq
        %v2556 = vshrl.u32 %v2555, 7
        %v2557 = vsub.s32 0, %v2556
        %v2558 = vrot.slane %v529, %v2557
        %v2559 = vlaneseq
        %v2560 = vshrl.u32 %v2559, 7
        %v2561 = vsub.s32 0, %v2560
        %v2562 = vrot.slane %v530, %v2561
        %v2563 = vmul.f32 %v1874, %v2550
        %v2564 = vmul.f32 %v1875, %v2554
        %v2565 = vmul.f32 %v1876, %v2558
        %v2566 = vmul.f32 %v1877, %v2562
        %v2567 = vmul.f32 %v1878, %v2550
        %v2568 = vmul.f32 %v1879, %v2554
        %v2569 = vmul.f32 %v1880, %v2558
        %v2570 = vmul.f32 %v1881, %v2562
        %v2571 = vmul.f32 %v1882, %v2550
        %v2572 = vmul.f32 %v1883, %v2554
        %v2573 = vmul.f32 %v1884, %v2558
        %v2574 = vmul.f32 %v1885, %v2562
        %v2575 = vmul.f32 %v1886, %v2550
        %v2576 = vmul.f32 %v1887, %v2554
        %v2577 = vmul.f32 %v1888, %v2558
        %v2578 = vmul.f32 %v1889, %v2562
        %v2579 = vmul.f32 %v1890, %v2550
        %v2580 = vmul.f32 %v1891, %v2554
        %v2581 = vmul.f32 %v1892, %v2558
        %v2582 = vmul.f32 %v1893, %v2562
        %v2583 = vmul.f32 %v1894, %v2550
        %v2584 = vmul.f32 %v1895, %v2554
        %v2585 = vmul.f32 %v1896, %v2558
        %v2586 = vmul.f32 %v1897, %v2562
        %v2587 = vmul.f32 %v1898, %v2550
        %v2588 = vmul.f32 %v1899, %v2554
        %v2589 = vmul.f32 %v1900, %v2558
        %v2590 = vmul.f32 %v1901, %v2562
        %v2591 = vmul.f32 %v1902, %v2550
        %v2592 = vmul.f32 %v1903, %v2554
        %v2593 = vmul.f32 %v1904, %v2558
        %v2594 = vmul.f32 %v1905, %v2562
        %v2595 = vmul.f32 %v1906, %v2550
        %v2596 = vmul.f32 %v1907, %v2554
        %v2597 = vmul.f32 %v1908, %v2558
        %v2598 = vmul.f32 %v1909, %v2562
        %v2599 = vmul.f32 %v1910, %v2550
        %v2600 = vmul.f32 %v1911, %v2554
        %v2601 = vmul.f32 %v1912, %v2558
        %v2602 = vmul.f32 %v1913, %v2562
        %v2603 = vmul.f32 %v1914, %v2550
        %v2604 = vmul.f32 %v1915, %v2554
        %v2605 = vmul.f32 %v1916, %v2558
        %v2606 = vmul.f32 %v1917, %v2562
        %v2607 = vmul.f32 %v1918, %v2550
        %v2608 = vmul.f32 %v1919, %v2554
        %v2609 = vmul.f32 %v1920, %v2558
        %v2610 = vmul.f32 %v1921, %v2562
        %v2611 = vmul.f32 %v1922, %v2550
        %v2612 = vmul.f32 %v1923, %v2554
        %v2613 = vmul.f32 %v1924, %v2558
        %v2614 = vmul.f32 %v1925, %v2562
        %v2615 = vmul.f32 %v1926, %v2550
        %v2616 = vmul.f32 %v1927, %v2554
        %v2617 = vmul.f32 %v1928, %v2558
        %v2618 = vmul.f32 %v1929, %v2562
        %v2619 = vmul.f32 %v1930, %v2550
        %v2620 = vmul.f32 %v1931, %v2554
        %v2621 = vmul.f32 %v1932, %v2558
        %v2622 = vmul.f32 %v1933, %v2562
        %v2623 = vmul.f32 %v1934, %v2550
        %v2624 = vmul.f32 %v1935, %v2554
        %v2625 = vmul.f32 %v1936, %v2558
        %v2626 = vmul.f32 %v1937, %v2562
        %v2691 = vrot.slane %v2563, 2
        %v2692 = vrot.slane %v2567, 2
        %v2693 = vsel %vm2082, %v2691, %v2692
        %v2694 = vrot.slane %v2564, 2
        %v2695 = vrot.slane %v2568, 2
        %v2696 = vsel %vm2082, %v2694, %v2695
        %v2697 = vrot.slane %v2565, 2
        %v2698 = vrot.slane %v2569, 2
        %v2699 = vsel %vm2082, %v2697, %v2698
        %v2700 = vrot.slane %v2566, 2
        %v2701 = vrot.slane %v2570, 2
        %v2702 = vsel %vm2082, %v2700, %v2701
        %v2703 = vrot.slane %v2571, 2
        %v2704 = vrot.slane %v2575, 2
        %v2705 = vsel %vm2082, %v2703, %v2704
        %v2706 = vrot.slane %v2572, 2
        %v2707 = vrot.slane %v2576, 2
        %v2708 = vsel %vm2082, %v2706, %v2707
        %v2709 = vrot.slane %v2573, 2
        %v2710 = vrot.slane %v2577, 2
        %v2711 = vsel %vm2082, %v2709, %v2710
        %v2712 = vrot.slane %v2574, 2
        %v2713 = vrot.slane %v2578, 2
        %v2714 = vsel %vm2082, %v2712, %v2713
        %v2715 = vrot.slane %v2579, 2
        %v2716 = vrot.slane %v2583, 2
        %v2717 = vsel %vm2082, %v2715, %v2716
        %v2718 = vrot.slane %v2580, 2
        %v2719 = vrot.slane %v2584, 2
        %v2720 = vsel %vm2082, %v2718, %v2719
        %v2721 = vrot.slane %v2581, 2
        %v2722 = vrot.slane %v2585, 2
        %v2723 = vsel %vm2082, %v2721, %v2722
        %v2724 = vrot.slane %v2582, 2
        %v2725 = vrot.slane %v2586, 2
        %v2726 = vsel %vm2082, %v2724, %v2725
        %v2727 = vrot.slane %v2587, 2
        %v2728 = vrot.slane %v2591, 2
        %v2729 = vsel %vm2082, %v2727, %v2728
        %v2730 = vrot.slane %v2588, 2
        %v2731 = vrot.slane %v2592, 2
        %v2732 = vsel %vm2082, %v2730, %v2731
        %v2733 = vrot.slane %v2589, 2
        %v2734 = vrot.slane %v2593, 2
        %v2735 = vsel %vm2082, %v2733, %v2734
        %v2736 = vrot.slane %v2590, 2
        %v2737 = vrot.slane %v2594, 2
        %v2738 = vsel %vm2082, %v2736, %v2737
        %v2739 = vrot.slane %v2595, 2
        %v2740 = vrot.slane %v2599, 2
        %v2741 = vsel %vm2082, %v2739, %v2740
        %v2742 = vrot.slane %v2596, 2
        %v2743 = vrot.slane %v2600, 2
        %v2744 = vsel %vm2082, %v2742, %v2743
        %v2745 = vrot.slane %v2597, 2
        %v2746 = vrot.slane %v2601, 2
        %v2747 = vsel %vm2082, %v2745, %v2746
        %v2748 = vrot.slane %v2598, 2
        %v2749 = vrot.slane %v2602, 2
        %v2750 = vsel %vm2082, %v2748, %v2749
        %v2751 = vrot.slane %v2603, 2
        %v2752 = vrot.slane %v2607, 2
        %v2753 = vsel %vm2082, %v2751, %v2752
        %v2754 = vrot.slane %v2604, 2
        %v2755 = vrot.slane %v2608, 2
        %v2756 = vsel %vm2082, %v2754, %v2755
        %v2757 = vrot.slane %v2605, 2
        %v2758 = vrot.slane %v2609, 2
        %v2759 = vsel %vm2082, %v2757, %v2758
        %v2760 = vrot.slane %v2606, 2
        %v2761 = vrot.slane %v2610, 2
        %v2762 = vsel %vm2082, %v2760, %v2761
        %v2763 = vrot.slane %v2611, 2
        %v2764 = vrot.slane %v2615, 2
        %v2765 = vsel %vm2082, %v2763, %v2764
        %v2766 = vrot.slane %v2612, 2
        %v2767 = vrot.slane %v2616, 2
        %v2768 = vsel %vm2082, %v2766, %v2767
        %v2769 = vrot.slane %v2613, 2
        %v2770 = vrot.slane %v2617, 2
        %v2771 = vsel %vm2082, %v2769, %v2770
        %v2772 = vrot.slane %v2614, 2
        %v2773 = vrot.slane %v2618, 2
        %v2774 = vsel %vm2082, %v2772, %v2773
        %v2775 = vrot.slane %v2619, 2
        %v2776 = vrot.slane %v2623, 2
        %v2777 = vsel %vm2082, %v2775, %v2776
        %v2778 = vrot.slane %v2620, 2
        %v2779 = vrot.slane %v2624, 2
        %v2780 = vsel %vm2082, %v2778, %v2779
        %v2781 = vrot.slane %v2621, 2
        %v2782 = vrot.slane %v2625, 2
        %v2783 = vsel %vm2082, %v2781, %v2782
        %v2784 = vrot.slane %v2622, 2
        %v2785 = vrot.slane %v2626, 2
        %v2786 = vsel %vm2082, %v2784, %v2785
        %v2819 = vadd.f32 %v2515, %v2693
        %v2820 = vadd.f32 %v2516, %v2696
        %v2821 = vadd.f32 %v2517, %v2699
        %v2822 = vadd.f32 %v2518, %v2702
        %v2823 = vadd.f32 %v2519, %v2705
        %v2824 = vadd.f32 %v2520, %v2708
        %v2825 = vadd.f32 %v2521, %v2711
        %v2826 = vadd.f32 %v2522, %v2714
        %v2827 = vadd.f32 %v2523, %v2717
        %v2828 = vadd.f32 %v2524, %v2720
        %v2829 = vadd.f32 %v2525, %v2723
        %v2830 = vadd.f32 %v2526, %v2726
        %v2831 = vadd.f32 %v2527, %v2729
        %v2832 = vadd.f32 %v2528, %v2732
        %v2833 = vadd.f32 %v2529, %v2735
        %v2834 = vadd.f32 %v2530, %v2738
        %v2835 = vadd.f32 %v2531, %v2741
        %v2836 = vadd.f32 %v2532, %v2744
        %v2837 = vadd.f32 %v2533, %v2747
        %v2838 = vadd.f32 %v2534, %v2750
        %v2839 = vadd.f32 %v2535, %v2753
        %v2840 = vadd.f32 %v2536, %v2756
        %v2841 = vadd.f32 %v2537, %v2759
        %v2842 = vadd.f32 %v2538, %v2762
        %v2843 = vadd.f32 %v2539, %v2765
        %v2844 = vadd.f32 %v2540, %v2768
        %v2845 = vadd.f32 %v2541, %v2771
        %v2846 = vadd.f32 %v2542, %v2774
        %v2847 = vadd.f32 %v2543, %v2777
        %v2848 = vadd.f32 %v2544, %v2780
        %v2849 = vadd.f32 %v2545, %v2783
        %v2850 = vadd.f32 %v2546, %v2786
        %2851 = vst [vmem:[%s236] sm:$0xff] %v2819
        %2852 = vst [vmem:[%s236 + $0x8] sm:$0xff] %v2820
        %2853 = vst [vmem:[%s236 + $0x10] sm:$0xff] %v2821
        %2854 = vst [vmem:[%s236 + $0x18] sm:$0xff] %v2822
        %2855 = vst [vmem:[%s236 + $0x20] sm:$0xff] %v2823
        %2856 = vst [vmem:[%s236 + $0x28] sm:$0xff] %v2824
        %2857 = vst [vmem:[%s236 + $0x30] sm:$0xff] %v2825
        %2858 = vst [vmem:[%s236 + $0x38] sm:$0xff] %v2826
        %2859 = vst [vmem:[%s236 + $0x40] sm:$0xff] %v2827
        %2860 = vst [vmem:[%s236 + $0x48] sm:$0xff] %v2828
        %2861 = vst [vmem:[%s236 + $0x50] sm:$0xff] %v2829
        %2862 = vst [vmem:[%s236 + $0x58] sm:$0xff] %v2830
        %2863 = vst [vmem:[%s236 + $0x60] sm:$0xff] %v2831
        %2864 = vst [vmem:[%s236 + $0x68] sm:$0xff] %v2832
        %2865 = vst [vmem:[%s236 + $0x70] sm:$0xff] %v2833
        %2866 = vst [vmem:[%s236 + $0x78] sm:$0xff] %v2834
        %2867 = vst [vmem:[%s236 + $0x80] sm:$0xff] %v2835
        %2868 = vst [vmem:[%s236 + $0x88] sm:$0xff] %v2836
        %2869 = vst [vmem:[%s236 + $0x90] sm:$0xff] %v2837
        %2870 = vst [vmem:[%s236 + $0x98] sm:$0xff] %v2838
        %2871 = vst [vmem:[%s236 + $0xa0] sm:$0xff] %v2839
        %2872 = vst [vmem:[%s236 + $0xa8] sm:$0xff] %v2840
        %2873 = vst [vmem:[%s236 + $0xb0] sm:$0xff] %v2841
        %2874 = vst [vmem:[%s236 + $0xb8] sm:$0xff] %v2842
        %2875 = vst [vmem:[%s236 + $0xc0] sm:$0xff] %v2843
        %2876 = vst [vmem:[%s236 + $0xc8] sm:$0xff] %v2844
        %2877 = vst [vmem:[%s236 + $0xd0] sm:$0xff] %v2845
        %2878 = vst [vmem:[%s236 + $0xd8] sm:$0xff] %v2846
        %2879 = vst [vmem:[%s236 + $0xe0] sm:$0xff] %v2847
        %2880 = vst [vmem:[%s236 + $0xe8] sm:$0xff] %v2848
        %2881 = vst [vmem:[%s236 + $0xf0] sm:$0xff] %v2849
        %2882 = vst [vmem:[%s236 + $0xf8] sm:$0xff] %v2850
        %s2883 = sand.u32 %s122, 1
        %s2884 = scalar_lea.sflag [#allocation5], %s2883
        %s2885 = sand.u32 %s122, 1
        %s2886 = smul.addr %s2885, 256
        %s2887 = scalar_lea.vmem [#allocation6], %s2886
        // Predicated region
        $region37: #{poscnn_forward.1} parent=31 // pred_check
          %p2888 = pneg %p132
        $region38: #{poscnn_forward.1} parent=31 // pred_check_branch
          %2890 = sbr.rel (%p2888) target = $region40
        $region39: #{poscnn_forward.1} parent=31 // pred_region
          %s2891 = smul.u32 4, %s25
          %s2893 = ssub.s32 4096, 4096
          %2894 = vsyncadd %s2884, %s2893
          %s2895 = smul.addr %s24, 32
          %s2896 = sadd.s32 %s2891, %s2895
          %s2897 = smul.addr %s2896, 128
          %s2898 = scalar_lea.hbm %s3, %s2897
          %s2899 = sshll.u32 %s2887, 4
          %s2900 = int_to_ptr.vmem [resolvable:$true] %s2899
          %2905 = dma.vmem_to_hbm [thread:$0]  %s2900, 4096, %s2898, %s2884, 512, 512, 32
        $region40: #{poscnn_forward.1} parent=31 // pred_fallthru
          _
      $region32: #{poscnn_forward.1} parent=5 // pred_fallthru
        _
      %p2906 = scmp.le.s32.totalorder 2, %s15
      // Predicated region
      $region41: #{poscnn_forward.1} parent=5 // pred_check
        %p2907 = pneg %p2906
      $region42: #{poscnn_forward.1} parent=5 // pred_check_branch
        %2909 = sbr.rel (%p2907) target = $region44
      $region43: #{poscnn_forward.1} parent=5 // pred_region
        %s2910 = ssub.s32 %s15, 2
        // Predicated region
        $region45: #{poscnn_forward.1} parent=43 // pred_check
          %p2911 = pneg %p138
        $region46: #{poscnn_forward.1} parent=43 // pred_check_branch
          %2913 = sbr.rel (%p2911) target = $region48
        $region47: #{poscnn_forward.1} parent=43 // pred_region
          %s2914 = sand.u32 %s123, 1
          %s2915 = scalar_lea.sflag [#allocation5], %s2914
          %s2916 = sand.u32 %s123, 1
          %s2917 = smul.addr %s2916, 256
          %s2918 = scalar_lea.vmem [#allocation6], %s2917
          %2919 = dma.done %s2915, 4096
        $region48: #{poscnn_forward.1} parent=43 // pred_fallthru
          _
      $region44: #{poscnn_forward.1} parent=5 // pred_fallthru
        _
    $region6: #{poscnn_forward.1} parent=1 // loop_footer
      %s19 = sadd.s32 1, %s15
    $region7: #{poscnn_forward.1} parent=1 // loop_footer_branch
      %14 = sbr.rel target = $region3
    $region8: #{poscnn_forward.1} parent=1 // loop_exit
      _
    %2920 = vsyncpa [#allocation4], 1
    %s2921 = scalar_lea.sflag [#allocation4], 1
    %2922 = vsyncpa %s2921, 1
    %2923 = vsyncpa [#allocation5], 1
    %s2924 = scalar_lea.sflag [#allocation5], 1
    %2925 = vsyncpa %s2924, 1

</llo_original>
